<compile_context>
chip_gen: v6e
topology: v6e:2x2x1
jax: 0.10.0
libtpu: 0.0.40
codegen_flags: <defaults>
</compile_context>

<pallas_src>
import math

import jax
import jax.numpy as jnp
from jax.experimental import pallas as pl
from jax.experimental.pallas import tpu as pltpu


def _norm(x, eps=1e-5):
    """LayerNorm statistics only (affine folded into the next Linear).
    mean and mean-of-squares are computed concurrently (independent reduces)."""
    mu = jnp.mean(x, axis=-1, keepdims=True)
    ms = jnp.mean(x * x, axis=-1, keepdims=True)
    var = jnp.maximum(ms - mu * mu, 0.0)
    return (x - mu) * jax.lax.rsqrt(var + eps)


def fusion_kernel(nir_ref, libs_ref, w1_ref, wslab_ref, vec_ref, out_ref):
    f32 = jnp.float32
    eps = 1e-5

    xn = nir_ref[...]            # [B, 366] f32
    xl = libs_ref[...]           # [B, 366] f32

    # ---- FeatureExtractor.ln1: joint LayerNorm over the 732 concatenated
    #      features from independent partial sums (no concat, no 2-pass chain).
    inv_n = 1.0 / 732.0
    s1 = (jnp.sum(xn, axis=-1, keepdims=True) +
          jnp.sum(xl, axis=-1, keepdims=True))
    s2 = (jnp.sum(xn * xn, axis=-1, keepdims=True) +
          jnp.sum(xl * xl, axis=-1, keepdims=True))
    mu = s1 * inv_n
    var = jnp.maximum(s2 * inv_n - mu * mu, 0.0)
    inv_std = jax.lax.rsqrt(var + eps)
    # Cast only at the MXU inputs; everything element-wise stays f32.
    xn_hat = ((xn - mu) * inv_std).astype(w1_ref.dtype)
    xl_hat = ((xl - mu) * inv_std).astype(w1_ref.dtype)

    # ---- fc1 (LN affine folded into weights/bias), split over the two halves.
    h = (jnp.dot(xn_hat, w1_ref[0], preferred_element_type=f32) +
         jnp.dot(xl_hat, w1_ref[1], preferred_element_type=f32) +
         vec_ref[:, 0:128])
    h = jnp.maximum(h, 0.0)

    # ---- ln2 + fc2 (affine folded) + ReLU -> features [B, 64]
    h = _norm(h)
    feat = jnp.maximum(
        jnp.dot(h, wslab_ref[:, 0:64], preferred_element_type=f32)
        + vec_ref[:, 128:192], 0.0)

    # ---- SelfAttention over the batch axis (x is 2-D).
    # Fused q/k/v against the lane-aligned 384-wide padded weight block;
    # the 1/sqrt(64) scale is folded into the q weights/bias.
    qkv = (jnp.dot(feat, wslab_ref[0:64, 128:512], preferred_element_type=f32)
           + vec_ref[:, 256:640])          # [B, 384]; q@0, k@128, v@256
    q = qkv[:, 0:64]
    k = qkv[:, 128:192]
    v = qkv[:, 256:320]
    scores = jax.lax.dot_general(q, k, (((1,), (1,)), ((), ())),
                                 preferred_element_type=f32)   # q @ k.T
    m = jnp.max(scores, axis=-1, keepdims=True)
    e = jnp.exp(scores - m)
    attn = e / jnp.sum(e, axis=-1, keepdims=True)              # exact divide
    feat = jnp.dot(attn, v, preferred_element_type=f32) + feat  # residual

    # ---- Head (ln1/fc1/rl1 -> ln3/fc3/rl3 -> ln4/fc4), LN affines folded.
    o = _norm(feat)
    o = jnp.maximum(
        jnp.dot(o, wslab_ref[0:64, 512:576], preferred_element_type=f32)
        + vec_ref[:, 640:704], 0.0)
    o = _norm(o)
    o = jnp.maximum(
        jnp.dot(o, wslab_ref[0:64, 640:672], preferred_element_type=f32)
        + vec_ref[:, 768:800], 0.0)
    o = _norm(o)                                               # [B, 32]

    # fc4 (32 -> 1) on the VPU: broadcast multiply + lane sum, no MXU pass.
    out_val = (jnp.sum(o * vec_ref[:, 896:928], axis=-1, keepdims=True)
               + vec_ref[:, 1024:1025])                        # [B, 1]
    # Lane-dense output; the wrapper slices column 0.
    out_ref[...] = jnp.broadcast_to(out_val, out_ref.shape)


def init_params(key):
    """PyTorch-style raw parameters; Linear weights already stored [in, out]."""
    def lin(key, fan_in, fan_out):
        kw, kb = jax.random.split(key)
        bound = 1.0 / math.sqrt(fan_in)
        w = jax.random.uniform(kw, (fan_in, fan_out), jnp.float32, -bound, bound)
        b = jax.random.uniform(kb, (1, fan_out), jnp.float32, -bound, bound)
        return w, b

    def ln(key, dim):
        kg, kb = jax.random.split(key)
        g = 1.0 + 0.01 * jax.random.normal(kg, (1, dim), jnp.float32)
        b = 0.01 * jax.random.normal(kb, (1, dim), jnp.float32)
        return g, b

    keys = jax.random.split(key, 13)
    p = {}
    p["fe_g1"], p["fe_b1"] = ln(keys[0], 732)
    p["fe_w1"], p["fe_c1"] = lin(keys[1], 732, 128)
    p["fe_g2"], p["fe_b2"] = ln(keys[2], 128)
    p["fe_w2"], p["fe_c2"] = lin(keys[3], 128, 64)
    p["wq"], p["bq"] = lin(keys[4], 64, 64)
    p["wk"], p["bk"] = lin(keys[5], 64, 64)
    p["wv"], p["bv"] = lin(keys[6], 64, 64)
    p["g1"], p["b1"] = ln(keys[7], 64)
    p["w1"], p["c1"] = lin(keys[8], 64, 64)
    p["g3"], p["b3"] = ln(keys[9], 64)
    p["w3"], p["c3"] = lin(keys[10], 64, 32)
    p["g4"], p["b4"] = ln(keys[11], 32)
    p["w4"], p["c4"] = lin(keys[12], 32, 1)
    return p


def prepare_params(p, w1_dtype=jnp.bfloat16):
    """One-time parameter prep: fold every LayerNorm affine into the Linear
    that follows it, fold the softmax scale into the q projection, and pack
    everything into 3 arrays with every segment starting on a 128-lane
    boundary:
      w1    [2, 366, 128]  (bf16 by default — the only sizable weight)
      wslab [128, 768]     fc2@0, wq@128, wk@256, wv@384, head-fc1@512, fc3@640
      vec   [1, 1152]      c1@0, c2@128, bq@256, bk@384, bv@512, ch1@640,
                           ch3@768, fc4-weight-row@896, fc4-bias@1024
    """
    f32 = jnp.float32

    def fold(g, b, w, c):
        # LN(x)@W + c == xhat @ (diag(g)W) + (c + b@W)
        return (g.reshape(-1, 1) * w).astype(f32), (c + b @ w).astype(f32)

    w1f, c1f = fold(p["fe_g1"], p["fe_b1"], p["fe_w1"], p["fe_c1"])
    w2f, c2f = fold(p["fe_g2"], p["fe_b2"], p["fe_w2"], p["fe_c2"])
    wh1, ch1 = fold(p["g1"], p["b1"], p["w1"], p["c1"])
    wh3, ch3 = fold(p["g3"], p["b3"], p["w3"], p["c3"])
    wh4, ch4 = fold(p["g4"], p["b4"], p["w4"], p["c4"])

    scale = 1.0 / math.sqrt(64.0)
    wq = p["wq"] * scale
    bq = p["bq"] * scale

    # Big fc1 weight, split into the nir/libs halves, merged into one array.
    w1 = jnp.stack([w1f[:366], w1f[366:]], axis=0).astype(w1_dtype)  # [2,366,128]

    # Small-weight slab, every block 128-lane aligned.
    wslab = jnp.zeros((128, 768), f32)
    wslab = wslab.at[:, 0:64].set(w2f)              # fc2 (128 -> 64)
    wslab = wslab.at[0:64, 128:192].set(wq)         # q (scale folded)
    wslab = wslab.at[0:64, 256:320].set(p["wk"])    # k
    wslab = wslab.at[0:64, 384:448].set(p["wv"])    # v
    wslab = wslab.at[0:64, 512:576].set(wh1)        # head fc1 (64 -> 64)
    wslab = wslab.at[0:64, 640:672].set(wh3)        # head fc3 (64 -> 32)

    # Vector slab: biases (LN betas folded in) + fc4 weight row, 128-aligned.
    vec = jnp.zeros((1, 1152), f32)
    vec = vec.at[:, 0:128].set(c1f)
    vec = vec.at[:, 128:192].set(c2f)
    vec = vec.at[:, 256:320].set(bq)
    vec = vec.at[:, 384:448].set(p["bk"])
    vec = vec.at[:, 512:576].set(p["bv"])
    vec = vec.at[:, 640:704].set(ch1)
    vec = vec.at[:, 768:800].set(ch3)
    vec = vec.at[:, 896:928].set(wh4.T)             # fc4 weight as a row [1,32]
    vec = vec.at[:, 1024:1025].set(ch4)             # fc4 bias (scalar)

    return {"w1": w1, "wslab": wslab, "vec": vec}


def fusion_forward(nir_data, libs_data, packed):
    nir = nir_data.astype(jnp.float32)
    libs = libs_data.astype(jnp.float32)
    B = nir.shape[0]
    args = [nir, libs, packed["w1"], packed["wslab"], packed["vec"]]

    def full_spec(a):
        return pl.BlockSpec(a.shape, lambda i: (0,) * a.ndim)

    out = pl.pallas_call(
        fusion_kernel,
        out_shape=jax.ShapeDtypeStruct((B, 128), jnp.float32),
        grid=(1,),
        in_specs=[full_spec(a) for a in args],
        out_specs=pl.BlockSpec((B, 128), lambda i: (0, 0)),
        compiler_params=pltpu.CompilerParams(
            dimension_semantics=("arbitrary",)),
    )(*args)
    return out[:, 0]  # lane-dense output -> squeeze


def fusion_forward_ref(nir_data, libs_data, p):
    """Pure-JAX f32 reference with the ORIGINAL (unfolded) parameters — also
    validates the folding/packing done in prepare_params."""
    def lnorm(x, g, b, eps=1e-5):
        mu = jnp.mean(x, -1, keepdims=True)
        var = jnp.mean((x - mu) ** 2, -1, keepdims=True)
        return (x - mu) / jnp.sqrt(var + eps) * g + b

    x = jnp.concatenate([nir_data, libs_data], axis=-1).astype(jnp.float32)
    h = lnorm(x, p["fe_g1"], p["fe_b1"])
    h = jax.nn.relu(h @ p["fe_w1"] + p["fe_c1"])
    h = lnorm(h, p["fe_g2"], p["fe_b2"])
    feat = jax.nn.relu(h @ p["fe_w2"] + p["fe_c2"])
    q = feat @ p["wq"] + p["bq"]
    k = feat @ p["wk"] + p["bk"]
    v = feat @ p["wv"] + p["bv"]
    attn = jax.nn.softmax((q @ k.T) / math.sqrt(64.0), axis=-1)
    feat = attn @ v + feat
    o = lnorm(feat, p["g1"], p["b1"])
    o = jax.nn.relu(o @ p["w1"] + p["c1"])
    o = lnorm(o, p["g3"], p["b3"])
    o = jax.nn.relu(o @ p["w3"] + p["c3"])
    o = lnorm(o, p["g4"], p["b4"])
    o = o @ p["w4"] + p["c4"]
    return o[:, 0]


if __name__ == "__main__":
    key = jax.random.PRNGKey(0)
    k_params, k_nir, k_libs = jax.random.split(key, 3)

    params = init_params(k_params)
    packed = prepare_params(params)          # one-time fold + pack (bf16 fc1)
    B = 8
    nir_data = jax.random.normal(k_nir, (B, 366), jnp.float32)
    libs_data = jax.random.normal(k_libs, (B, 366), jnp.float32)

    out = fusion_forward(nir_data, libs_data, packed)
    out = jax.block_until_ready(out)

    ref = fusion_forward_ref(nir_data, libs_data, params)
    assert out.shape == (B,)
    # Tolerance covers bf16 inputs to the K=366 fc1 matmuls (LN-scaled
    # activations, f32 accumulation) plus the f32 rounding reorder introduced
    # by folding the LN affines into the Linears.
    assert jnp.allclose(out, ref, rtol=3e-2, atol=3e-2), (
        out, ref, float(jnp.max(jnp.abs(out - ref))))
    print("KERNEL_OK")
</pallas_src>

<mosaic_0001>
module attributes {stable_mosaic.version = 11 : i64} {
  func.func @fusion_kernel(%arg0: i32, %arg1: memref<8x366xf32, #tpu.memory_space<vmem>>, %arg2: memref<8x366xf32, #tpu.memory_space<vmem>>, %arg3: memref<2x366x128xbf16, #tpu.memory_space<vmem>>, %arg4: memref<128x768xf32, #tpu.memory_space<vmem>>, %arg5: memref<1x1152xf32, #tpu.memory_space<vmem>>, %arg6: memref<8x128xf32, #tpu.memory_space<vmem>>) attributes {dimension_semantics = [#tpu.dimension_semantics<arbitrary>], iteration_bounds = array<i64: 1>, scalar_prefetch = 0 : i64, scratch_operands = 0 : i64, tpu.core_type = #tpu.core_type<tc>, window_params = [{pipeline_mode = #tpu.pipeline_mode<synchronous>, transform_indices = @transform_0, window_bounds = array<i64: 8, 366>}, {pipeline_mode = #tpu.pipeline_mode<synchronous>, transform_indices = @transform_1, window_bounds = array<i64: 8, 366>}, {pipeline_mode = #tpu.pipeline_mode<synchronous>, transform_indices = @transform_2, window_bounds = array<i64: 2, 366, 128>}, {pipeline_mode = #tpu.pipeline_mode<synchronous>, transform_indices = @transform_3, window_bounds = array<i64: 128, 768>}, {pipeline_mode = #tpu.pipeline_mode<synchronous>, transform_indices = @transform_4, window_bounds = array<i64: 1, 1152>}, {pipeline_mode = #tpu.pipeline_mode<synchronous>, transform_indices = @transform_5, window_bounds = array<i64: 8, 128>}]} {
    %c0 = arith.constant 0 : index
    %c0_0 = arith.constant 0 : index
    %0 = vector.load %arg1[%c0, %c0_0] : memref<8x366xf32, #tpu.memory_space<vmem>>, vector<8x366xf32>
    %c0_1 = arith.constant 0 : index
    %c0_2 = arith.constant 0 : index
    %1 = vector.load %arg2[%c0_1, %c0_2] : memref<8x366xf32, #tpu.memory_space<vmem>>, vector<8x366xf32>
    %cst = arith.constant dense<0.000000e+00> : vector<8xf32>
    %2 = vector.multi_reduction <add>, %0, %cst [1] : vector<8x366xf32> to vector<8xf32>
    %3 = vector.shape_cast %2 : vector<8xf32> to vector<8x1xf32>
    %cst_3 = arith.constant dense<0.000000e+00> : vector<8xf32>
    %4 = vector.multi_reduction <add>, %1, %cst_3 [1] : vector<8x366xf32> to vector<8xf32>
    %5 = vector.shape_cast %4 : vector<8xf32> to vector<8x1xf32>
    %6 = arith.addf %3, %5 : vector<8x1xf32>
    %7 = arith.mulf %0, %0 : vector<8x366xf32>
    %cst_4 = arith.constant dense<0.000000e+00> : vector<8xf32>
    %8 = vector.multi_reduction <add>, %7, %cst_4 [1] : vector<8x366xf32> to vector<8xf32>
    %9 = vector.shape_cast %8 : vector<8xf32> to vector<8x1xf32>
    %10 = arith.mulf %1, %1 : vector<8x366xf32>
    %cst_5 = arith.constant dense<0.000000e+00> : vector<8xf32>
    %11 = vector.multi_reduction <add>, %10, %cst_5 [1] : vector<8x366xf32> to vector<8xf32>
    %12 = vector.shape_cast %11 : vector<8xf32> to vector<8x1xf32>
    %13 = arith.addf %9, %12 : vector<8x1xf32>
    %cst_6 = arith.constant 0.00136612018 : f32
    %14 = vector.broadcast %cst_6 : f32 to vector<8x1xf32>
    %15 = arith.mulf %6, %14 : vector<8x1xf32>
    %cst_7 = arith.constant 0.00136612018 : f32
    %16 = vector.broadcast %cst_7 : f32 to vector<8x1xf32>
    %17 = arith.mulf %13, %16 : vector<8x1xf32>
    %18 = arith.mulf %15, %15 : vector<8x1xf32>
    %19 = arith.subf %17, %18 : vector<8x1xf32>
    %cst_8 = arith.constant 0.000000e+00 : f32
    %20 = vector.broadcast %cst_8 : f32 to vector<8x1xf32>
    %21 = arith.maximumf %19, %20 : vector<8x1xf32>
    %cst_9 = arith.constant 9.99999974E-6 : f32
    %22 = vector.broadcast %cst_9 : f32 to vector<8x1xf32>
    %23 = arith.addf %21, %22 : vector<8x1xf32>
    %24 = math.rsqrt %23 : vector<8x1xf32>
    %25 = vector.broadcast %15 : vector<8x1xf32> to vector<8x366xf32>
    %26 = arith.subf %0, %25 : vector<8x366xf32>
    %27 = vector.broadcast %24 : vector<8x1xf32> to vector<8x366xf32>
    %28 = arith.mulf %26, %27 : vector<8x366xf32>
    %29 = arith.truncf %28 : vector<8x366xf32> to vector<8x366xbf16>
    %30 = vector.broadcast %15 : vector<8x1xf32> to vector<8x366xf32>
    %31 = arith.subf %1, %30 : vector<8x366xf32>
    %32 = vector.broadcast %24 : vector<8x1xf32> to vector<8x366xf32>
    %33 = arith.mulf %31, %32 : vector<8x366xf32>
    %34 = arith.truncf %33 : vector<8x366xf32> to vector<8x366xbf16>
    %c0_10 = arith.constant 0 : index
    %c0_11 = arith.constant 0 : index
    %c0_12 = arith.constant 0 : index
    %35 = vector.load %arg3[%c0_10, %c0_11, %c0_12] : memref<2x366x128xbf16, #tpu.memory_space<vmem>>, vector<1x366x128xbf16>
    %36 = vector.shape_cast %35 : vector<1x366x128xbf16> to vector<366x128xbf16>
    %cst_13 = arith.constant dense<0.000000e+00> : vector<8x128xf32>
    %37 = tpu.matmul %29, %36, %cst_13 {dimension_numbers = #tpu.dot_dimension_numbers<[1], [0], [0], [1], [0, 0, 1, 1], [], []>} : vector<8x366xbf16>, vector<366x128xbf16>, vector<8x128xf32> -> vector<8x128xf32>
    %c1 = arith.constant 1 : index
    %c0_14 = arith.constant 0 : index
    %c0_15 = arith.constant 0 : index
    %38 = vector.load %arg3[%c1, %c0_14, %c0_15] : memref<2x366x128xbf16, #tpu.memory_space<vmem>>, vector<1x366x128xbf16>
    %39 = vector.shape_cast %38 : vector<1x366x128xbf16> to vector<366x128xbf16>
    %cst_16 = arith.constant dense<0.000000e+00> : vector<8x128xf32>
    %40 = tpu.matmul %34, %39, %cst_16 {dimension_numbers = #tpu.dot_dimension_numbers<[1], [0], [0], [1], [0, 0, 1, 1], [], []>} : vector<8x366xbf16>, vector<366x128xbf16>, vector<8x128xf32> -> vector<8x128xf32>
    %41 = arith.addf %37, %40 : vector<8x128xf32>
    %c0_17 = arith.constant 0 : index
    %c0_18 = arith.constant 0 : index
    %42 = vector.load %arg5[%c0_17, %c0_18] : memref<1x1152xf32, #tpu.memory_space<vmem>>, vector<1x128xf32>
    %43 = vector.broadcast %42 : vector<1x128xf32> to vector<8x128xf32>
    %44 = arith.addf %41, %43 : vector<8x128xf32>
    %cst_19 = arith.constant 0.000000e+00 : f32
    %45 = vector.broadcast %cst_19 : f32 to vector<8x128xf32>
    %46 = arith.maximumf %44, %45 : vector<8x128xf32>
    %cst_20 = arith.constant dense<0.000000e+00> : vector<8xf32>
    %47 = vector.multi_reduction <add>, %46, %cst_20 [1] : vector<8x128xf32> to vector<8xf32>
    %48 = vector.shape_cast %47 : vector<8xf32> to vector<8x1xf32>
    %cst_21 = arith.constant 1.280000e+02 : f32
    %49 = vector.broadcast %cst_21 : f32 to vector<8x1xf32>
    %50 = arith.divf %48, %49 : vector<8x1xf32>
    %51 = arith.mulf %46, %46 : vector<8x128xf32>
    %cst_22 = arith.constant dense<0.000000e+00> : vector<8xf32>
    %52 = vector.multi_reduction <add>, %51, %cst_22 [1] : vector<8x128xf32> to vector<8xf32>
    %53 = vector.shape_cast %52 : vector<8xf32> to vector<8x1xf32>
    %cst_23 = arith.constant 1.280000e+02 : f32
    %54 = vector.broadcast %cst_23 : f32 to vector<8x1xf32>
    %55 = arith.divf %53, %54 : vector<8x1xf32>
    %56 = arith.mulf %50, %50 : vector<8x1xf32>
    %57 = arith.subf %55, %56 : vector<8x1xf32>
    %cst_24 = arith.constant 0.000000e+00 : f32
    %58 = vector.broadcast %cst_24 : f32 to vector<8x1xf32>
    %59 = arith.maximumf %57, %58 : vector<8x1xf32>
    %60 = vector.broadcast %50 : vector<8x1xf32> to vector<8x128xf32>
    %61 = arith.subf %46, %60 : vector<8x128xf32>
    %cst_25 = arith.constant 9.99999974E-6 : f32
    %62 = vector.broadcast %cst_25 : f32 to vector<8x1xf32>
    %63 = arith.addf %59, %62 : vector<8x1xf32>
    %64 = math.rsqrt %63 : vector<8x1xf32>
    %65 = vector.broadcast %64 : vector<8x1xf32> to vector<8x128xf32>
    %66 = arith.mulf %61, %65 : vector<8x128xf32>
    %c0_26 = arith.constant 0 : index
    %c0_27 = arith.constant 0 : index
    %67 = vector.load %arg4[%c0_26, %c0_27] : memref<128x768xf32, #tpu.memory_space<vmem>>, vector<128x64xf32>
    %cst_28 = arith.constant dense<0.000000e+00> : vector<8x64xf32>
    %68 = tpu.matmul %66, %67, %cst_28 {dimension_numbers = #tpu.dot_dimension_numbers<[1], [0], [0], [1], [0, 0, 1, 1], [], []>} : vector<8x128xf32>, vector<128x64xf32>, vector<8x64xf32> -> vector<8x64xf32>
    %c0_29 = arith.constant 0 : index
    %c128 = arith.constant 128 : index
    %69 = vector.load %arg5[%c0_29, %c128] : memref<1x1152xf32, #tpu.memory_space<vmem>>, vector<1x64xf32>
    %70 = vector.broadcast %69 : vector<1x64xf32> to vector<8x64xf32>
    %71 = arith.addf %68, %70 : vector<8x64xf32>
    %cst_30 = arith.constant 0.000000e+00 : f32
    %72 = vector.broadcast %cst_30 : f32 to vector<8x64xf32>
    %73 = arith.maximumf %71, %72 : vector<8x64xf32>
    %c0_31 = arith.constant 0 : index
    %c128_32 = arith.constant 128 : index
    %74 = vector.load %arg4[%c0_31, %c128_32] : memref<128x768xf32, #tpu.memory_space<vmem>>, vector<64x384xf32>
    %cst_33 = arith.constant dense<0.000000e+00> : vector<8x384xf32>
    %75 = tpu.matmul %73, %74, %cst_33 {dimension_numbers = #tpu.dot_dimension_numbers<[1], [0], [0], [1], [0, 0, 1, 1], [], []>} : vector<8x64xf32>, vector<64x384xf32>, vector<8x384xf32> -> vector<8x384xf32>
    %c0_34 = arith.constant 0 : index
    %c256 = arith.constant 256 : index
    %76 = vector.load %arg5[%c0_34, %c256] : memref<1x1152xf32, #tpu.memory_space<vmem>>, vector<1x384xf32>
    %77 = vector.broadcast %76 : vector<1x384xf32> to vector<8x384xf32>
    %78 = arith.addf %75, %77 : vector<8x384xf32>
    %79 = vector.extract_strided_slice %78 {offsets = [0, 0], sizes = [8, 64], strides = [1, 1]} : vector<8x384xf32> to vector<8x64xf32>
    %80 = vector.extract_strided_slice %78 {offsets = [0, 128], sizes = [8, 64], strides = [1, 1]} : vector<8x384xf32> to vector<8x64xf32>
    %81 = vector.extract_strided_slice %78 {offsets = [0, 256], sizes = [8, 64], strides = [1, 1]} : vector<8x384xf32> to vector<8x64xf32>
    %cst_35 = arith.constant dense<0.000000e+00> : vector<8x8xf32>
    %82 = tpu.matmul %79, %80, %cst_35 {dimension_numbers = #tpu.dot_dimension_numbers<[1], [1], [0], [0], [0, 0, 1, 0], [], []>} : vector<8x64xf32>, vector<8x64xf32>, vector<8x8xf32> -> vector<8x8xf32>
    %cst_36 = arith.constant dense<0xFF800000> : vector<8xf32>
    %83 = vector.multi_reduction <maximumf>, %82, %cst_36 [1] : vector<8x8xf32> to vector<8xf32>
    %84 = vector.shape_cast %83 : vector<8xf32> to vector<8x1xf32>
    %85 = vector.broadcast %84 : vector<8x1xf32> to vector<8x8xf32>
    %86 = arith.subf %82, %85 : vector<8x8xf32>
    %87 = math.exp %86 : vector<8x8xf32>
    %cst_37 = arith.constant dense<0.000000e+00> : vector<8xf32>
    %88 = vector.multi_reduction <add>, %87, %cst_37 [1] : vector<8x8xf32> to vector<8xf32>
    %89 = vector.shape_cast %88 : vector<8xf32> to vector<8x1xf32>
    %90 = vector.broadcast %89 : vector<8x1xf32> to vector<8x8xf32>
    %91 = arith.divf %87, %90 : vector<8x8xf32>
    %cst_38 = arith.constant dense<0.000000e+00> : vector<8x64xf32>
    %92 = tpu.matmul %91, %81, %cst_38 {dimension_numbers = #tpu.dot_dimension_numbers<[1], [0], [0], [1], [0, 0, 1, 1], [], []>} : vector<8x8xf32>, vector<8x64xf32>, vector<8x64xf32> -> vector<8x64xf32>
    %93 = arith.addf %92, %73 : vector<8x64xf32>
    %cst_39 = arith.constant dense<0.000000e+00> : vector<8xf32>
    %94 = vector.multi_reduction <add>, %93, %cst_39 [1] : vector<8x64xf32> to vector<8xf32>
    %95 = vector.shape_cast %94 : vector<8xf32> to vector<8x1xf32>
    %cst_40 = arith.constant 6.400000e+01 : f32
    %96 = vector.broadcast %cst_40 : f32 to vector<8x1xf32>
    %97 = arith.divf %95, %96 : vector<8x1xf32>
    %98 = arith.mulf %93, %93 : vector<8x64xf32>
    %cst_41 = arith.constant dense<0.000000e+00> : vector<8xf32>
    %99 = vector.multi_reduction <add>, %98, %cst_41 [1] : vector<8x64xf32> to vector<8xf32>
    %100 = vector.shape_cast %99 : vector<8xf32> to vector<8x1xf32>
    %cst_42 = arith.constant 6.400000e+01 : f32
    %101 = vector.broadcast %cst_42 : f32 to vector<8x1xf32>
    %102 = arith.divf %100, %101 : vector<8x1xf32>
    %103 = arith.mulf %97, %97 : vector<8x1xf32>
    %104 = arith.subf %102, %103 : vector<8x1xf32>
    %cst_43 = arith.constant 0.000000e+00 : f32
    %105 = vector.broadcast %cst_43 : f32 to vector<8x1xf32>
    %106 = arith.maximumf %104, %105 : vector<8x1xf32>
    %107 = vector.broadcast %97 : vector<8x1xf32> to vector<8x64xf32>
    %108 = arith.subf %93, %107 : vector<8x64xf32>
    %cst_44 = arith.constant 9.99999974E-6 : f32
    %109 = vector.broadcast %cst_44 : f32 to vector<8x1xf32>
    %110 = arith.addf %106, %109 : vector<8x1xf32>
    %111 = math.rsqrt %110 : vector<8x1xf32>
    %112 = vector.broadcast %111 : vector<8x1xf32> to vector<8x64xf32>
    %113 = arith.mulf %108, %112 : vector<8x64xf32>
    %c0_45 = arith.constant 0 : index
    %c512 = arith.constant 512 : index
    %114 = vector.load %arg4[%c0_45, %c512] : memref<128x768xf32, #tpu.memory_space<vmem>>, vector<64x64xf32>
    %cst_46 = arith.constant dense<0.000000e+00> : vector<8x64xf32>
    %115 = tpu.matmul %113, %114, %cst_46 {dimension_numbers = #tpu.dot_dimension_numbers<[1], [0], [0], [1], [0, 0, 1, 1], [], []>} : vector<8x64xf32>, vector<64x64xf32>, vector<8x64xf32> -> vector<8x64xf32>
    %c0_47 = arith.constant 0 : index
    %c640 = arith.constant 640 : index
    %116 = vector.load %arg5[%c0_47, %c640] : memref<1x1152xf32, #tpu.memory_space<vmem>>, vector<1x64xf32>
    %117 = vector.broadcast %116 : vector<1x64xf32> to vector<8x64xf32>
    %118 = arith.addf %115, %117 : vector<8x64xf32>
    %cst_48 = arith.constant 0.000000e+00 : f32
    %119 = vector.broadcast %cst_48 : f32 to vector<8x64xf32>
    %120 = arith.maximumf %118, %119 : vector<8x64xf32>
    %cst_49 = arith.constant dense<0.000000e+00> : vector<8xf32>
    %121 = vector.multi_reduction <add>, %120, %cst_49 [1] : vector<8x64xf32> to vector<8xf32>
    %122 = vector.shape_cast %121 : vector<8xf32> to vector<8x1xf32>
    %cst_50 = arith.constant 6.400000e+01 : f32
    %123 = vector.broadcast %cst_50 : f32 to vector<8x1xf32>
    %124 = arith.divf %122, %123 : vector<8x1xf32>
    %125 = arith.mulf %120, %120 : vector<8x64xf32>
    %cst_51 = arith.constant dense<0.000000e+00> : vector<8xf32>
    %126 = vector.multi_reduction <add>, %125, %cst_51 [1] : vector<8x64xf32> to vector<8xf32>
    %127 = vector.shape_cast %126 : vector<8xf32> to vector<8x1xf32>
    %cst_52 = arith.constant 6.400000e+01 : f32
    %128 = vector.broadcast %cst_52 : f32 to vector<8x1xf32>
    %129 = arith.divf %127, %128 : vector<8x1xf32>
    %130 = arith.mulf %124, %124 : vector<8x1xf32>
    %131 = arith.subf %129, %130 : vector<8x1xf32>
    %cst_53 = arith.constant 0.000000e+00 : f32
    %132 = vector.broadcast %cst_53 : f32 to vector<8x1xf32>
    %133 = arith.maximumf %131, %132 : vector<8x1xf32>
    %134 = vector.broadcast %124 : vector<8x1xf32> to vector<8x64xf32>
    %135 = arith.subf %120, %134 : vector<8x64xf32>
    %cst_54 = arith.constant 9.99999974E-6 : f32
    %136 = vector.broadcast %cst_54 : f32 to vector<8x1xf32>
    %137 = arith.addf %133, %136 : vector<8x1xf32>
    %138 = math.rsqrt %137 : vector<8x1xf32>
    %139 = vector.broadcast %138 : vector<8x1xf32> to vector<8x64xf32>
    %140 = arith.mulf %135, %139 : vector<8x64xf32>
    %c0_55 = arith.constant 0 : index
    %c640_56 = arith.constant 640 : index
    %141 = vector.load %arg4[%c0_55, %c640_56] : memref<128x768xf32, #tpu.memory_space<vmem>>, vector<64x32xf32>
    %cst_57 = arith.constant dense<0.000000e+00> : vector<8x32xf32>
    %142 = tpu.matmul %140, %141, %cst_57 {dimension_numbers = #tpu.dot_dimension_numbers<[1], [0], [0], [1], [0, 0, 1, 1], [], []>} : vector<8x64xf32>, vector<64x32xf32>, vector<8x32xf32> -> vector<8x32xf32>
    %c0_58 = arith.constant 0 : index
    %c768 = arith.constant 768 : index
    %143 = vector.load %arg5[%c0_58, %c768] : memref<1x1152xf32, #tpu.memory_space<vmem>>, vector<1x32xf32>
    %144 = vector.broadcast %143 : vector<1x32xf32> to vector<8x32xf32>
    %145 = arith.addf %142, %144 : vector<8x32xf32>
    %cst_59 = arith.constant 0.000000e+00 : f32
    %146 = vector.broadcast %cst_59 : f32 to vector<8x32xf32>
    %147 = arith.maximumf %145, %146 : vector<8x32xf32>
    %cst_60 = arith.constant dense<0.000000e+00> : vector<8xf32>
    %148 = vector.multi_reduction <add>, %147, %cst_60 [1] : vector<8x32xf32> to vector<8xf32>
    %149 = vector.shape_cast %148 : vector<8xf32> to vector<8x1xf32>
    %cst_61 = arith.constant 3.200000e+01 : f32
    %150 = vector.broadcast %cst_61 : f32 to vector<8x1xf32>
    %151 = arith.divf %149, %150 : vector<8x1xf32>
    %152 = arith.mulf %147, %147 : vector<8x32xf32>
    %cst_62 = arith.constant dense<0.000000e+00> : vector<8xf32>
    %153 = vector.multi_reduction <add>, %152, %cst_62 [1] : vector<8x32xf32> to vector<8xf32>
    %154 = vector.shape_cast %153 : vector<8xf32> to vector<8x1xf32>
    %cst_63 = arith.constant 3.200000e+01 : f32
    %155 = vector.broadcast %cst_63 : f32 to vector<8x1xf32>
    %156 = arith.divf %154, %155 : vector<8x1xf32>
    %157 = arith.mulf %151, %151 : vector<8x1xf32>
    %158 = arith.subf %156, %157 : vector<8x1xf32>
    %cst_64 = arith.constant 0.000000e+00 : f32
    %159 = vector.broadcast %cst_64 : f32 to vector<8x1xf32>
    %160 = arith.maximumf %158, %159 : vector<8x1xf32>
    %161 = vector.broadcast %151 : vector<8x1xf32> to vector<8x32xf32>
    %162 = arith.subf %147, %161 : vector<8x32xf32>
    %cst_65 = arith.constant 9.99999974E-6 : f32
    %163 = vector.broadcast %cst_65 : f32 to vector<8x1xf32>
    %164 = arith.addf %160, %163 : vector<8x1xf32>
    %165 = math.rsqrt %164 : vector<8x1xf32>
    %166 = vector.broadcast %165 : vector<8x1xf32> to vector<8x32xf32>
    %167 = arith.mulf %162, %166 : vector<8x32xf32>
    %c0_66 = arith.constant 0 : index
    %c896 = arith.constant 896 : index
    %168 = vector.load %arg5[%c0_66, %c896] : memref<1x1152xf32, #tpu.memory_space<vmem>>, vector<1x32xf32>
    %169 = vector.broadcast %168 : vector<1x32xf32> to vector<8x32xf32>
    %170 = arith.mulf %167, %169 : vector<8x32xf32>
    %cst_67 = arith.constant dense<0.000000e+00> : vector<8xf32>
    %171 = vector.multi_reduction <add>, %170, %cst_67 [1] : vector<8x32xf32> to vector<8xf32>
    %172 = vector.shape_cast %171 : vector<8xf32> to vector<8x1xf32>
    %c0_68 = arith.constant 0 : index
    %c1024 = arith.constant 1024 : index
    %173 = vector.load %arg5[%c0_68, %c1024] : memref<1x1152xf32, #tpu.memory_space<vmem>>, vector<1x1xf32>
    %174 = vector.broadcast %173 : vector<1x1xf32> to vector<8x1xf32>
    %175 = arith.addf %172, %174 : vector<8x1xf32>
    %176 = vector.shape_cast %175 : vector<8x1xf32> to vector<8x1xf32>
    %177 = vector.broadcast %176 : vector<8x1xf32> to vector<8x128xf32>
    %c0_69 = arith.constant 0 : index
    %c0_70 = arith.constant 0 : index
    %178 = vector.load %arg6[%c0_69, %c0_70] : memref<8x128xf32, #tpu.memory_space<vmem>>, vector<8x128xf32>
    tpu.vector_store %arg6[%c0_69, %c0_70], %177 {strides = array<i32>} : memref<8x128xf32, #tpu.memory_space<vmem>>, vector<8x128xf32>,
    return
  }
  func.func @transform_0(%arg0: i32) -> (i32, i32) {
    %c0_i32 = arith.constant 0 : i32
    %c0_i32_0 = arith.constant 0 : i32
    %c0_i32_1 = arith.constant 0 : i32
    return %c0_i32, %c0_i32_0 : i32, i32
  }
  func.func @transform_1(%arg0: i32) -> (i32, i32) {
    %c0_i32 = arith.constant 0 : i32
    %c0_i32_0 = arith.constant 0 : i32
    %c0_i32_1 = arith.constant 0 : i32
    return %c0_i32, %c0_i32_0 : i32, i32
  }
  func.func @transform_2(%arg0: i32) -> (i32, i32, i32) {
    %c0_i32 = arith.constant 0 : i32
    %c0_i32_0 = arith.constant 0 : i32
    %c0_i32_1 = arith.constant 0 : i32
    %c0_i32_2 = arith.constant 0 : i32
    return %c0_i32, %c0_i32_0, %c0_i32_1 : i32, i32, i32
  }
  func.func @transform_3(%arg0: i32) -> (i32, i32) {
    %c0_i32 = arith.constant 0 : i32
    %c0_i32_0 = arith.constant 0 : i32
    %c0_i32_1 = arith.constant 0 : i32
    return %c0_i32, %c0_i32_0 : i32, i32
  }
  func.func @transform_4(%arg0: i32) -> (i32, i32) {
    %c0_i32 = arith.constant 0 : i32
    %c0_i32_0 = arith.constant 0 : i32
    %c0_i32_1 = arith.constant 0 : i32
    return %c0_i32, %c0_i32_0 : i32, i32
  }
  func.func @transform_5(%arg0: i32) -> (i32, i32) {
    %c0_i32 = arith.constant 0 : i32
    %c0_i32_0 = arith.constant 0 : i32
    %c0_i32_1 = arith.constant 0 : i32
    return %c0_i32, %c0_i32_0 : i32, i32
  }
}

</mosaic_0001>

<llo_original>
// kernel: tpu_custom_call.1
$region0: #{tpu_custom_call.1}
  #allocation0 [shape = 'u32[]', space=smem, size = 0x4, offset = 0x4, fixed_abs, tag = 'smem constant byte address 0x4 - core index']
  #allocation1 [shape = 'u32[144,128]{1,0:T(1,128)}', space=vmem, size = 0x12000, scoped, tag = 'internal scratch']
  %s0 = inlined_call_operand.vmem [shape: f32[8,366], index: 0, kind: input, shape index: {}]
  %s1 = inlined_call_operand.vmem [shape: f32[8,366], index: 1, kind: input, shape index: {}]
  %s2 = inlined_call_operand.vmem [shape: bf16[2,366,128], index: 2, kind: input, shape index: {}]
  %s3 = inlined_call_operand.hbm [shape: f32[128,768], index: 3, kind: input, shape index: {}]
  %s4 = inlined_call_operand.vmem [shape: f32[1,1152], index: 4, kind: input, shape index: {}]
  %s5 = inlined_call_operand.hbm [shape: f32[8,128], index: 5, kind: output, shape index: {}]
  %s6 = sld [smem:[#allocation0]]
  $region34: #{tpu_custom_call.1} parent=0
    _
  %s8 = ssub.s32 1, %s6
  %s9 = scalar_select 0, %s8, %s6
  $region1: #{tpu_custom_call.1} parent=0
    #allocation2 [shape = 'u8[393216]{0}', space=vmem, size = 0x60000, scoped, tag = 'input window, operand 3, single buffered']
    #allocation3 [shape = 's32[1]{0}', space=sflag, size = 0x4, scoped, tag = 'scoped memory for tpu_custom_call.1']
    #allocation4 [shape = 's32[1]{0}', space=sflag, size = 0x4, scoped, tag = 'scoped memory for tpu_custom_call.1']
    #allocation5 [shape = 'u8[4096]{0}', space=vmem, size = 0x1000, scoped, tag = 'output window, operand 0, single buffered']
    %10 = vsyncpa [#allocation3], 0
    %11 = vsyncpa [#allocation4], 0
    // Predicated region
    $region2: #{tpu_custom_call.1} parent=1 // pred_check
      _
    $region3: #{tpu_custom_call.1} parent=1 // pred_check_branch
      %13 = sbr.rel (0) target = $region5
    $region4: #{tpu_custom_call.1} parent=1 // pred_region
      _
    $region5: #{tpu_custom_call.1} parent=1 // pred_fallthru
      _
    // Predicated region
    $region6: #{tpu_custom_call.1} parent=1 // pred_check
      _
    $region7: #{tpu_custom_call.1} parent=1 // pred_check_branch
      %15 = sbr.rel (0) target = $region9
    $region8: #{tpu_custom_call.1} parent=1 // pred_region
      _
    $region9: #{tpu_custom_call.1} parent=1 // pred_fallthru
      _
    // Predicated region
    $region10: #{tpu_custom_call.1} parent=1 // pred_check
      _
    $region11: #{tpu_custom_call.1} parent=1 // pred_check_branch
      %17 = sbr.rel (0) target = $region13
    $region12: #{tpu_custom_call.1} parent=1 // pred_region
      _
    $region13: #{tpu_custom_call.1} parent=1 // pred_fallthru
      _
    // Predicated region
    $region14: #{tpu_custom_call.1} parent=1 // pred_check
      _
    $region15: #{tpu_custom_call.1} parent=1 // pred_check_branch
      %19 = sbr.rel (0) target = $region17
    $region16: #{tpu_custom_call.1} parent=1 // pred_region
      %s21 = ssub.s32 12288, 12288
      %22 = vsyncadd [#allocation3], %s21
      %s23 = sshll.u32 [#allocation2], 4
      %s24 = int_to_ptr.vmem [resolvable:$true] %s23
      %29 = dma.hbm_to_vmem [thread:$0]  %s3, 12288, %s24, [#allocation3], 768, 768, 48
    $region17: #{tpu_custom_call.1} parent=1 // pred_fallthru
      _
    // Predicated region
    $region18: #{tpu_custom_call.1} parent=1 // pred_check
      _
    $region19: #{tpu_custom_call.1} parent=1 // pred_check_branch
      %31 = sbr.rel (0) target = $region21
    $region20: #{tpu_custom_call.1} parent=1 // pred_region
      _
    $region21: #{tpu_custom_call.1} parent=1 // pred_fallthru
      _
    // Predicated region
    $region22: #{tpu_custom_call.1} parent=1 // pred_check
      _
    $region23: #{tpu_custom_call.1} parent=1 // pred_check_branch
      %33 = sbr.rel (0) target = $region25
    $region24: #{tpu_custom_call.1} parent=1 // pred_region
      %34 = dma.done [#allocation3], 12288
    $region25: #{tpu_custom_call.1} parent=1 // pred_fallthru
      _
    %v36 = vld [vmem:[%s0] sm:$0xff]
    %v37 = vld [vmem:[%s0 + $0x8] sm:$0xff]
    %v38 = vld [vmem:[%s0 + $0x10] sm:$0xff]
    %v39 = vld [vmem:[%s1] sm:$0xff]
    %v40 = vld [vmem:[%s1 + $0x8] sm:$0xff]
    %v41 = vld [vmem:[%s1 + $0x10] sm:$0xff]
    %v42 = vadd.f32 %v36, %v37
    %vm43 = vcmask 900096
    %v44 = vsel %vm43, %v38, 0.0
    %v45 = vadd.f32 %v42, %v44
    %46 = vadd.xlane.f32.xlu0 %v45
    %v47 = vpop.xlane.xlu0 %46
    %v48 = vadd.f32 %v39, %v40
    %v49 = vsel %vm43, %v41, 0.0
    %v50 = vadd.f32 %v48, %v49
    %51 = vadd.xlane.f32.xlu0 %v50
    %v52 = vpop.xlane.xlu0 %51
    %v53 = vadd.f32 %v47, %v52
    %v54 = vmul.f32 %v36, %v36
    %v55 = vmul.f32 %v37, %v37
    %v56 = vmul.f32 %v38, %v38
    %v57 = vadd.f32 %v54, %v55
    %v58 = vsel %vm43, %v56, 0.0
    %v59 = vadd.f32 %v57, %v58
    %60 = vadd.xlane.f32.xlu0 %v59
    %v61 = vpop.xlane.xlu0 %60
    %v62 = vmul.f32 %v39, %v39
    %v63 = vmul.f32 %v40, %v40
    %v64 = vmul.f32 %v41, %v41
    %v65 = vadd.f32 %v62, %v63
    %v66 = vsel %vm43, %v64, 0.0
    %v67 = vadd.f32 %v65, %v66
    %68 = vadd.xlane.f32.xlu0 %v67
    %v69 = vpop.xlane.xlu0 %68
    %v70 = vadd.f32 %v61, %v69
    %v71 = vmul.f32 %v53, 0.0013661202
    %v72 = vmul.f32 %v70, 0.0013661202
    %v73 = vmul.f32 %v71, %v71
    %v74 = vsub.f32 %v72, %v73
    %v75 = vmax.f32 %v74, 0.0
    %v76 = vadd.f32 %v75, 1e-05
    %v77 = vrsqrt.pop %v76
    %v78 = vsub.f32 %v36, %v71
    %v79 = vsub.f32 %v37, %v71
    %v80 = vsub.f32 %v38, %v71
    %v81 = vmul.f32 %v78, %v77
    %v82 = vmul.f32 %v79, %v77
    %v83 = vmul.f32 %v80, %v77
    %v84 = vpack.c.bf16 %v81, %v81
    %v85 = vpack.c.bf16 %v82, %v82
    %v86 = vpack.c.bf16 %v83, %v83
    %v87 = vsub.f32 %v39, %v71
    %v88 = vsub.f32 %v40, %v71
    %v89 = vsub.f32 %v41, %v71
    %v90 = vmul.f32 %v87, %v77
    %v91 = vmul.f32 %v88, %v77
    %v92 = vmul.f32 %v89, %v77
    %v93 = vpack.c.bf16 %v90, %v90
    %v94 = vpack.c.bf16 %v91, %v91
    %v95 = vpack.c.bf16 %v92, %v92
    %v96 = vld [vmem:[%s2] sm:$0xf]
    %v97 = vld [vmem:[%s2 + $0x4] sm:$0xf]
    %v98 = vld [vmem:[%s2 + $0x8] sm:$0xf]
    %v99 = vld [vmem:[%s2 + $0xc] sm:$0xf]
    %v100 = vld [vmem:[%s2 + $0x10] sm:$0xf]
    %v101 = vld [vmem:[%s2 + $0x14] sm:$0xf]
    %v102 = vld [vmem:[%s2 + $0x18] sm:$0xf]
    %v103 = vld [vmem:[%s2 + $0x1c] sm:$0xf]
    %v104 = vld [vmem:[%s2 + $0x20] sm:$0xf]
    %v105 = vld [vmem:[%s2 + $0x24] sm:$0xf]
    %v106 = vld [vmem:[%s2 + $0x28] sm:$0xf]
    %v107 = vld [vmem:[%s2 + $0x2c] sm:$0xf]
    %v108 = vld [vmem:[%s2 + $0x30] sm:$0xf]
    %v109 = vld [vmem:[%s2 + $0x34] sm:$0xf]
    %v110 = vld [vmem:[%s2 + $0x38] sm:$0xf]
    %v111 = vld [vmem:[%s2 + $0x3c] sm:$0xf]
    %v112 = vld [vmem:[%s2 + $0x40] sm:$0xf]
    %v113 = vld [vmem:[%s2 + $0x44] sm:$0xf]
    %v114 = vld [vmem:[%s2 + $0x48] sm:$0xf]
    %v115 = vld [vmem:[%s2 + $0x4c] sm:$0xf]
    %v116 = vld [vmem:[%s2 + $0x50] sm:$0xf]
    %v117 = vld [vmem:[%s2 + $0x54] sm:$0xf]
    %v118 = vld [vmem:[%s2 + $0x58] sm:$0xf]
    %v119 = vld [vmem:[%s2 + $0x5c] sm:$0xf]
    %v120 = vld [vmem:[%s2 + $0x60] sm:$0xf]
    %v121 = vld [vmem:[%s2 + $0x64] sm:$0xf]
    %v122 = vld [vmem:[%s2 + $0x68] sm:$0xf]
    %v123 = vld [vmem:[%s2 + $0x6c] sm:$0xf]
    %v124 = vld [vmem:[%s2 + $0x70] sm:$0xf]
    %v125 = vld [vmem:[%s2 + $0x74] sm:$0xf]
    %v126 = vld [vmem:[%s2 + $0x78] sm:$0xf]
    %v127 = vld [vmem:[%s2 + $0x7c] sm:$0xf]
    %v128 = vld [vmem:[%s2 + $0x80] sm:$0xf]
    %v129 = vld [vmem:[%s2 + $0x84] sm:$0xf]
    %v130 = vld [vmem:[%s2 + $0x88] sm:$0xf]
    %v131 = vld [vmem:[%s2 + $0x8c] sm:$0xf]
    %v132 = vld [vmem:[%s2 + $0x90] sm:$0xf]
    %v133 = vld [vmem:[%s2 + $0x94] sm:$0xf]
    %v134 = vld [vmem:[%s2 + $0x98] sm:$0xf]
    %v135 = vld [vmem:[%s2 + $0x9c] sm:$0xf]
    %v136 = vld [vmem:[%s2 + $0xa0] sm:$0xf]
    %v137 = vld [vmem:[%s2 + $0xa4] sm:$0xf]
    %v138 = vld [vmem:[%s2 + $0xa8] sm:$0xf]
    %v139 = vld [vmem:[%s2 + $0xac] sm:$0xf]
    %v140 = vld [vmem:[%s2 + $0xb0] sm:$0xf]
    %v141 = vld [vmem:[%s2 + $0xb4] sm:$0x7]
    %s142 = scalar_lea.vmem %s2, 184
    %v143 = vld [vmem:[%s142] sm:$0xf]
    %v144 = vld [vmem:[%s142 + $0x4] sm:$0xf]
    %v145 = vld [vmem:[%s142 + $0x8] sm:$0xf]
    %v146 = vld [vmem:[%s142 + $0xc] sm:$0xf]
    %v147 = vld [vmem:[%s142 + $0x10] sm:$0xf]
    %v148 = vld [vmem:[%s142 + $0x14] sm:$0xf]
    %v149 = vld [vmem:[%s142 + $0x18] sm:$0xf]
    %v150 = vld [vmem:[%s142 + $0x1c] sm:$0xf]
    %v151 = vld [vmem:[%s142 + $0x20] sm:$0xf]
    %v152 = vld [vmem:[%s142 + $0x24] sm:$0xf]
    %v153 = vld [vmem:[%s142 + $0x28] sm:$0xf]
    %v154 = vld [vmem:[%s142 + $0x2c] sm:$0xf]
    %v155 = vld [vmem:[%s142 + $0x30] sm:$0xf]
    %v156 = vld [vmem:[%s142 + $0x34] sm:$0xf]
    %v157 = vld [vmem:[%s142 + $0x38] sm:$0xf]
    %v158 = vld [vmem:[%s142 + $0x3c] sm:$0xf]
    %v159 = vld [vmem:[%s142 + $0x40] sm:$0xf]
    %v160 = vld [vmem:[%s142 + $0x44] sm:$0xf]
    %v161 = vld [vmem:[%s142 + $0x48] sm:$0xf]
    %v162 = vld [vmem:[%s142 + $0x4c] sm:$0xf]
    %v163 = vld [vmem:[%s142 + $0x50] sm:$0xf]
    %v164 = vld [vmem:[%s142 + $0x54] sm:$0xf]
    %v165 = vld [vmem:[%s142 + $0x58] sm:$0xf]
    %v166 = vld [vmem:[%s142 + $0x5c] sm:$0xf]
    %v167 = vld [vmem:[%s142 + $0x60] sm:$0xf]
    %v168 = vld [vmem:[%s142 + $0x64] sm:$0xf]
    %v169 = vld [vmem:[%s142 + $0x68] sm:$0xf]
    %v170 = vld [vmem:[%s142 + $0x6c] sm:$0xf]
    %v171 = vld [vmem:[%s142 + $0x70] sm:$0xf]
    %v172 = vld [vmem:[%s142 + $0x74] sm:$0xf]
    %v173 = vld [vmem:[%s142 + $0x78] sm:$0xf]
    %v174 = vld [vmem:[%s142 + $0x7c] sm:$0xf]
    %v175 = vld [vmem:[%s142 + $0x80] sm:$0xf]
    %v176 = vld [vmem:[%s142 + $0x84] sm:$0xf]
    %v177 = vld [vmem:[%s142 + $0x88] sm:$0xf]
    %v178 = vld [vmem:[%s142 + $0x8c] sm:$0xf]
    %v179 = vld [vmem:[%s142 + $0x90] sm:$0xf]
    %v180 = vld [vmem:[%s142 + $0x94] sm:$0xf]
    %v181 = vld [vmem:[%s142 + $0x98] sm:$0xf]
    %v182 = vld [vmem:[%s142 + $0x9c] sm:$0xf]
    %v183 = vld [vmem:[%s142 + $0xa0] sm:$0xf]
    %v184 = vld [vmem:[%s142 + $0xa4] sm:$0xf]
    %v185 = vld [vmem:[%s142 + $0xa8] sm:$0xf]
    %v186 = vld [vmem:[%s142 + $0xac] sm:$0xf]
    %v187 = vld [vmem:[%s142 + $0xb0] sm:$0xf]
    %v188 = vld [vmem:[%s142 + $0xb4] sm:$0x7]
    %v235 = vunpack.c.l.b16 %v143
    %v236 = vunpack.c.l.b16 %v144
    %v237 = vunpack.c.l.b16 %v145
    %v238 = vunpack.c.l.b16 %v146
    %v239 = vunpack.c.l.b16 %v147
    %v240 = vunpack.c.l.b16 %v148
    %v241 = vunpack.c.l.b16 %v149
    %v242 = vunpack.c.l.b16 %v150
    %v243 = vunpack.c.l.b16 %v151
    %v244 = vunpack.c.l.b16 %v152
    %v245 = vunpack.c.l.b16 %v153
    %v246 = vunpack.c.l.b16 %v154
    %v247 = vunpack.c.l.b16 %v155
    %v248 = vunpack.c.l.b16 %v156
    %v249 = vunpack.c.l.b16 %v157
    %v250 = vunpack.c.l.b16 %v158
    %v251 = vunpack.c.l.b16 %v159
    %v252 = vunpack.c.l.b16 %v160
    %v253 = vunpack.c.l.b16 %v161
    %v254 = vunpack.c.l.b16 %v162
    %v255 = vunpack.c.l.b16 %v163
    %v256 = vunpack.c.l.b16 %v164
    %v257 = vunpack.c.l.b16 %v165
    %v258 = vunpack.c.l.b16 %v166
    %v259 = vunpack.c.l.b16 %v167
    %v260 = vunpack.c.l.b16 %v168
    %v261 = vunpack.c.l.b16 %v169
    %v262 = vunpack.c.l.b16 %v170
    %v263 = vunpack.c.l.b16 %v171
    %v264 = vunpack.c.l.b16 %v172
    %v265 = vunpack.c.l.b16 %v173
    %v266 = vunpack.c.l.b16 %v174
    %v267 = vunpack.c.l.b16 %v175
    %v268 = vunpack.c.l.b16 %v176
    %v269 = vunpack.c.l.b16 %v177
    %v270 = vunpack.c.l.b16 %v178
    %v271 = vunpack.c.l.b16 %v179
    %v272 = vunpack.c.l.b16 %v180
    %v273 = vunpack.c.l.b16 %v181
    %v274 = vunpack.c.l.b16 %v182
    %v275 = vunpack.c.l.b16 %v183
    %v276 = vunpack.c.l.b16 %v184
    %v277 = vunpack.c.l.b16 %v185
    %v278 = vunpack.c.l.b16 %v186
    %v279 = vunpack.c.l.b16 %v187
    %v280 = vunpack.c.l.b16 %v188
    %v281 = vpack.c.b16 %v236, %v235
    %v282 = vpack.c.b16 %v238, %v237
    %v283 = vpack.c.b16 %v240, %v239
    %v284 = vpack.c.b16 %v242, %v241
    %v285 = vpack.c.b16 %v244, %v243
    %v286 = vpack.c.b16 %v246, %v245
    %v287 = vpack.c.b16 %v248, %v247
    %v288 = vpack.c.b16 %v250, %v249
    %v289 = vpack.c.b16 %v252, %v251
    %v290 = vpack.c.b16 %v254, %v253
    %v291 = vpack.c.b16 %v256, %v255
    %v292 = vpack.c.b16 %v258, %v257
    %v293 = vpack.c.b16 %v260, %v259
    %v294 = vpack.c.b16 %v262, %v261
    %v295 = vpack.c.b16 %v264, %v263
    %v296 = vpack.c.b16 %v266, %v265
    %v297 = vpack.c.b16 %v268, %v267
    %v298 = vpack.c.b16 %v270, %v269
    %v299 = vpack.c.b16 %v272, %v271
    %v300 = vpack.c.b16 %v274, %v273
    %v301 = vpack.c.b16 %v276, %v275
    %v302 = vpack.c.b16 %v278, %v277
    %v303 = vpack.c.b16 %v280, %v279
    %v327 = vsel %vm43, %v95, 0
    %vm329 = vcmask 1046528
    %v331 = vsel %vm329, %v303, 0
    %333 = vmatprep.subr.bf16.mxu0 0
    %334 = vmatpush1.bf16.msra.mxu0 %v288
    %335 = vmatprep.subr.bf16.mxu0 0
    %336 = vmatpush1.bf16.msra.mxu0 %v287
    %337 = vmatprep.subr.bf16.mxu0 0
    %338 = vmatpush1.bf16.msra.mxu0 %v286
    %339 = vmatprep.subr.bf16.mxu0 0
    %340 = vmatpush1.bf16.msra.mxu0 %v285
    %341 = vmatprep.subr.bf16.mxu0 0
    %342 = vmatpush1.bf16.msra.mxu0 %v284
    %343 = vmatprep.subr.bf16.mxu0 0
    %344 = vmatpush1.bf16.msra.mxu0 %v283
    %345 = vmatprep.subr.bf16.mxu0 0
    %346 = vmatpush1.bf16.msra.mxu0 %v282
    %347 = vmatprep.subr.bf16.mxu0 0
    %348 = vmatpush1.bf16.msra.mxu0 %v281
    %349 = vmatprep.subr.bf16.mxu0 0
    %350 = vmatpush2.bf16.msra.mxu0 %v296
    %351 = vmatprep.subr.bf16.mxu0 0
    %352 = vmatpush2.bf16.msra.mxu0 %v295
    %353 = vmatprep.subr.bf16.mxu0 0
    %354 = vmatpush2.bf16.msra.mxu0 %v294
    %355 = vmatprep.subr.bf16.mxu0 0
    %356 = vmatpush2.bf16.msra.mxu0 %v293
    %357 = vmatprep.subr.bf16.mxu0 0
    %358 = vmatpush2.bf16.msra.mxu0 %v292
    %359 = vmatprep.subr.bf16.mxu0 0
    %360 = vmatpush2.bf16.msra.mxu0 %v291
    %361 = vmatprep.subr.bf16.mxu0 0
    %362 = vmatpush2.bf16.msra.mxu0 %v290
    %363 = vmatprep.subr.bf16.mxu0 0
    %364 = vmatpush2.bf16.msra.mxu0 %v289
    %365 = vmatprep.mubr.bf16.mxu0 %v94
    %366 = vmatmul.mubr.bf16.gmra.mxu0 %v93
    %v367 = vpop.f32.mrf.mxu0
    %v368 = vadd.f32 0.0, %v367
    %v369 = vpop.f32.mrf.mxu0
    %v370 = vpop.f32.mrf.mxu0
    %v371 = vpop.f32.mrf.mxu0
    %372 = vdwg.mxu0
    %373 = vmatprep.subr.bf16.mxu0 0
    %374 = vmatpush1.bf16.msra.mxu0 0
    %375 = vmatprep.subr.bf16.mxu0 0
    %376 = vmatpush1.bf16.msra.mxu0 %v331
    %377 = vmatprep.subr.bf16.mxu0 0
    %378 = vmatpush1.bf16.msra.mxu0 %v302
    %379 = vmatprep.subr.bf16.mxu0 0
    %380 = vmatpush1.bf16.msra.mxu0 %v301
    %381 = vmatprep.subr.bf16.mxu0 0
    %382 = vmatpush1.bf16.msra.mxu0 %v300
    %383 = vmatprep.subr.bf16.mxu0 0
    %384 = vmatpush1.bf16.msra.mxu0 %v299
    %385 = vmatprep.subr.bf16.mxu0 0
    %386 = vmatpush1.bf16.msra.mxu0 %v298
    %387 = vmatprep.subr.bf16.mxu0 0
    %388 = vmatpush1.bf16.msra.mxu0 %v297
    %389 = vmatprep.subr.bf16.mxu0 0
    %390 = vmatpush2.bf16.msra.mxu0 0
    %391 = vmatprep.subr.bf16.mxu0 0
    %392 = vmatpush2.bf16.msra.mxu0 0
    %393 = vmatprep.subr.bf16.mxu0 0
    %394 = vmatpush2.bf16.msra.mxu0 0
    %395 = vmatprep.subr.bf16.mxu0 0
    %396 = vmatpush2.bf16.msra.mxu0 0
    %397 = vmatprep.subr.bf16.mxu0 0
    %398 = vmatpush2.bf16.msra.mxu0 0
    %399 = vmatprep.subr.bf16.mxu0 0
    %400 = vmatpush2.bf16.msra.mxu0 0
    %401 = vmatprep.subr.bf16.mxu0 0
    %402 = vmatpush2.bf16.msra.mxu0 0
    %403 = vmatprep.subr.bf16.mxu0 0
    %404 = vmatpush2.bf16.msra.mxu0 0
    %405 = vmatprep.mubr.bf16.mxu0 0
    %406 = vmatmul.mubr.bf16.gmra.mxu0 %v327
    %v407 = vpop.f32.mrf.mxu0
    %v408 = vadd.f32 %v368, %v407
    %v409 = vpop.f32.mrf.mxu0
    %v410 = vpop.f32.mrf.mxu0
    %v411 = vpop.f32.mrf.mxu0
    %412 = vdwg.mxu0
    %v459 = vunpack.c.l.b16 %v96
    %v460 = vunpack.c.l.b16 %v97
    %v461 = vunpack.c.l.b16 %v98
    %v462 = vunpack.c.l.b16 %v99
    %v463 = vunpack.c.l.b16 %v100
    %v464 = vunpack.c.l.b16 %v101
    %v465 = vunpack.c.l.b16 %v102
    %v466 = vunpack.c.l.b16 %v103
    %v467 = vunpack.c.l.b16 %v104
    %v468 = vunpack.c.l.b16 %v105
    %v469 = vunpack.c.l.b16 %v106
    %v470 = vunpack.c.l.b16 %v107
    %v471 = vunpack.c.l.b16 %v108
    %v472 = vunpack.c.l.b16 %v109
    %v473 = vunpack.c.l.b16 %v110
    %v474 = vunpack.c.l.b16 %v111
    %v475 = vunpack.c.l.b16 %v112
    %v476 = vunpack.c.l.b16 %v113
    %v477 = vunpack.c.l.b16 %v114
    %v478 = vunpack.c.l.b16 %v115
    %v479 = vunpack.c.l.b16 %v116
    %v480 = vunpack.c.l.b16 %v117
    %v481 = vunpack.c.l.b16 %v118
    %v482 = vunpack.c.l.b16 %v119
    %v483 = vunpack.c.l.b16 %v120
    %v484 = vunpack.c.l.b16 %v121
    %v485 = vunpack.c.l.b16 %v122
    %v486 = vunpack.c.l.b16 %v123
    %v487 = vunpack.c.l.b16 %v124
    %v488 = vunpack.c.l.b16 %v125
    %v489 = vunpack.c.l.b16 %v126
    %v490 = vunpack.c.l.b16 %v127
    %v491 = vunpack.c.l.b16 %v128
    %v492 = vunpack.c.l.b16 %v129
    %v493 = vunpack.c.l.b16 %v130
    %v494 = vunpack.c.l.b16 %v131
    %v495 = vunpack.c.l.b16 %v132
    %v496 = vunpack.c.l.b16 %v133
    %v497 = vunpack.c.l.b16 %v134
    %v498 = vunpack.c.l.b16 %v135
    %v499 = vunpack.c.l.b16 %v136
    %v500 = vunpack.c.l.b16 %v137
    %v501 = vunpack.c.l.b16 %v138
    %v502 = vunpack.c.l.b16 %v139
    %v503 = vunpack.c.l.b16 %v140
    %v504 = vunpack.c.l.b16 %v141
    %v505 = vpack.c.b16 %v460, %v459
    %v506 = vpack.c.b16 %v462, %v461
    %v507 = vpack.c.b16 %v464, %v463
    %v508 = vpack.c.b16 %v466, %v465
    %v509 = vpack.c.b16 %v468, %v467
    %v510 = vpack.c.b16 %v470, %v469
    %v511 = vpack.c.b16 %v472, %v471
    %v512 = vpack.c.b16 %v474, %v473
    %v513 = vpack.c.b16 %v476, %v475
    %v514 = vpack.c.b16 %v478, %v477
    %v515 = vpack.c.b16 %v480, %v479
    %v516 = vpack.c.b16 %v482, %v481
    %v517 = vpack.c.b16 %v484, %v483
    %v518 = vpack.c.b16 %v486, %v485
    %v519 = vpack.c.b16 %v488, %v487
    %v520 = vpack.c.b16 %v490, %v489
    %v521 = vpack.c.b16 %v492, %v491
    %v522 = vpack.c.b16 %v494, %v493
    %v523 = vpack.c.b16 %v496, %v495
    %v524 = vpack.c.b16 %v498, %v497
    %v525 = vpack.c.b16 %v500, %v499
    %v526 = vpack.c.b16 %v502, %v501
    %v527 = vpack.c.b16 %v504, %v503
    %v551 = vsel %vm43, %v86, 0
    %v554 = vsel %vm329, %v527, 0
    %556 = vmatprep.subr.bf16.mxu0 0
    %557 = vmatpush1.bf16.msra.mxu0 %v512
    %558 = vmatprep.subr.bf16.mxu0 0
    %559 = vmatpush1.bf16.msra.mxu0 %v511
    %560 = vmatprep.subr.bf16.mxu0 0
    %561 = vmatpush1.bf16.msra.mxu0 %v510
    %562 = vmatprep.subr.bf16.mxu0 0
    %563 = vmatpush1.bf16.msra.mxu0 %v509
    %564 = vmatprep.subr.bf16.mxu0 0
    %565 = vmatpush1.bf16.msra.mxu0 %v508
    %566 = vmatprep.subr.bf16.mxu0 0
    %567 = vmatpush1.bf16.msra.mxu0 %v507
    %568 = vmatprep.subr.bf16.mxu0 0
    %569 = vmatpush1.bf16.msra.mxu0 %v506
    %570 = vmatprep.subr.bf16.mxu0 0
    %571 = vmatpush1.bf16.msra.mxu0 %v505
    %572 = vmatprep.subr.bf16.mxu0 0
    %573 = vmatpush2.bf16.msra.mxu0 %v520
    %574 = vmatprep.subr.bf16.mxu0 0
    %575 = vmatpush2.bf16.msra.mxu0 %v519
    %576 = vmatprep.subr.bf16.mxu0 0
    %577 = vmatpush2.bf16.msra.mxu0 %v518
    %578 = vmatprep.subr.bf16.mxu0 0
    %579 = vmatpush2.bf16.msra.mxu0 %v517
    %580 = vmatprep.subr.bf16.mxu0 0
    %581 = vmatpush2.bf16.msra.mxu0 %v516
    %582 = vmatprep.subr.bf16.mxu0 0
    %583 = vmatpush2.bf16.msra.mxu0 %v515
    %584 = vmatprep.subr.bf16.mxu0 0
    %585 = vmatpush2.bf16.msra.mxu0 %v514
    %586 = vmatprep.subr.bf16.mxu0 0
    %587 = vmatpush2.bf16.msra.mxu0 %v513
    %588 = vmatprep.mubr.bf16.mxu0 %v85
    %589 = vmatmul.mubr.bf16.gmra.mxu0 %v84
    %v590 = vpop.f32.mrf.mxu0
    %v591 = vadd.f32 %v408, %v590
    %v592 = vpop.f32.mrf.mxu0
    %v593 = vpop.f32.mrf.mxu0
    %v594 = vpop.f32.mrf.mxu0
    %595 = vdwg.mxu0
    %596 = vmatprep.subr.bf16.mxu0 0
    %597 = vmatpush1.bf16.msra.mxu0 0
    %598 = vmatprep.subr.bf16.mxu0 0
    %599 = vmatpush1.bf16.msra.mxu0 %v554
    %600 = vmatprep.subr.bf16.mxu0 0
    %601 = vmatpush1.bf16.msra.mxu0 %v526
    %602 = vmatprep.subr.bf16.mxu0 0
    %603 = vmatpush1.bf16.msra.mxu0 %v525
    %604 = vmatprep.subr.bf16.mxu0 0
    %605 = vmatpush1.bf16.msra.mxu0 %v524
    %606 = vmatprep.subr.bf16.mxu0 0
    %607 = vmatpush1.bf16.msra.mxu0 %v523
    %608 = vmatprep.subr.bf16.mxu0 0
    %609 = vmatpush1.bf16.msra.mxu0 %v522
    %610 = vmatprep.subr.bf16.mxu0 0
    %611 = vmatpush1.bf16.msra.mxu0 %v521
    %612 = vmatprep.subr.bf16.mxu0 0
    %613 = vmatpush2.bf16.msra.mxu0 0
    %614 = vmatprep.subr.bf16.mxu0 0
    %615 = vmatpush2.bf16.msra.mxu0 0
    %616 = vmatprep.subr.bf16.mxu0 0
    %617 = vmatpush2.bf16.msra.mxu0 0
    %618 = vmatprep.subr.bf16.mxu0 0
    %619 = vmatpush2.bf16.msra.mxu0 0
    %620 = vmatprep.subr.bf16.mxu0 0
    %621 = vmatpush2.bf16.msra.mxu0 0
    %622 = vmatprep.subr.bf16.mxu0 0
    %623 = vmatpush2.bf16.msra.mxu0 0
    %624 = vmatprep.subr.bf16.mxu0 0
    %625 = vmatpush2.bf16.msra.mxu0 0
    %626 = vmatprep.subr.bf16.mxu0 0
    %627 = vmatpush2.bf16.msra.mxu0 0
    %628 = vmatprep.mubr.bf16.mxu0 0
    %629 = vmatmul.mubr.bf16.gmra.mxu0 %v551
    %v630 = vpop.f32.mrf.mxu0
    %v631 = vadd.f32 %v591, %v630
    %v632 = vpop.f32.mrf.mxu0
    %v633 = vpop.f32.mrf.mxu0
    %v634 = vpop.f32.mrf.mxu0
    %635 = vdwg.mxu0
    %v636 = vld [vmem:[%s4] sm:$0x1]
    %v638 = vlaneseq
    %v639 = vshrl.u32 %v638, 7
    %v640 = vsub.s32 0, %v639
    %v641 = vrot.slane %v636, %v640
    %v643 = vadd.f32 %v631, %v641
    %v644 = vmax.f32 %v643, 0.0
    %645 = vadd.xlane.f32.xlu0 %v644
    %v646 = vpop.xlane.xlu0 %645
    %v647 = vrcp.pop 128.0
    %v648 = vmul.f32 %v646, %v647
    %v649 = vmul.f32 %v644, %v644
    %650 = vadd.xlane.f32.xlu0 %v649
    %v651 = vpop.xlane.xlu0 %650
    %v652 = vmul.f32 %v651, %v647
    %v653 = vmul.f32 %v648, %v648
    %v654 = vsub.f32 %v652, %v653
    %v655 = vmax.f32 %v654, 0.0
    %v656 = vsub.f32 %v644, %v648
    %v657 = vadd.f32 %v655, 1e-05
    %v658 = vrsqrt.pop %v657
    %v659 = vmul.f32 %v656, %v658
    %v660 = vld [vmem:[#allocation2] sm:$0xff]
    %v661 = vld [vmem:[#allocation2 + $0x30] sm:$0xff]
    %v662 = vld [vmem:[#allocation2 + $0x60] sm:$0xff]
    %v663 = vld [vmem:[#allocation2 + $0x90] sm:$0xff]
    %v664 = vld [vmem:[#allocation2 + $0xc0] sm:$0xff]
    %v665 = vld [vmem:[#allocation2 + $0xf0] sm:$0xff]
    %v666 = vld [vmem:[#allocation2 + $0x120] sm:$0xff]
    %v667 = vld [vmem:[#allocation2 + $0x150] sm:$0xff]
    %v668 = vld [vmem:[#allocation2 + $0x180] sm:$0xff]
    %v669 = vld [vmem:[#allocation2 + $0x1b0] sm:$0xff]
    %v670 = vld [vmem:[#allocation2 + $0x1e0] sm:$0xff]
    %v671 = vld [vmem:[#allocation2 + $0x210] sm:$0xff]
    %v672 = vld [vmem:[#allocation2 + $0x240] sm:$0xff]
    %v673 = vld [vmem:[#allocation2 + $0x270] sm:$0xff]
    %v674 = vld [vmem:[#allocation2 + $0x2a0] sm:$0xff]
    %v675 = vld [vmem:[#allocation2 + $0x2d0] sm:$0xff]
    %v676 = vld [vmem:[%s4 + $0x1] sm:$0x1]
    %v678 = vlaneseq
    %v679 = vshrl.u32 %v678, 7
    %v680 = vsub.s32 0, %v679
    %v681 = vrot.slane %v676, %v680
    %683 = vmatprep.subr.mxu0 0.0
    %684 = vmatpush1.msra.mxu0 %v675
    %685 = vmatprep.subr.mxu0 0.0
    %686 = vmatpush1.msra.mxu0 %v674
    %687 = vmatprep.subr.mxu0 0.0
    %688 = vmatpush1.msra.mxu0 %v673
    %689 = vmatprep.subr.mxu0 0.0
    %690 = vmatpush1.msra.mxu0 %v672
    %691 = vmatprep.subr.mxu0 0.0
    %692 = vmatpush1.msra.mxu0 %v671
    %693 = vmatprep.subr.mxu0 0.0
    %694 = vmatpush1.msra.mxu0 %v670
    %695 = vmatprep.subr.mxu0 0.0
    %696 = vmatpush1.msra.mxu0 %v669
    %697 = vmatprep.subr.mxu0 0.0
    %698 = vmatpush1.msra.mxu0 %v668
    %699 = vmatprep.subr.mxu0 0.0
    %700 = vmatpush1.msra.mxu0 %v667
    %701 = vmatprep.subr.mxu0 0.0
    %702 = vmatpush1.msra.mxu0 %v666
    %703 = vmatprep.subr.mxu0 0.0
    %704 = vmatpush1.msra.mxu0 %v665
    %705 = vmatprep.subr.mxu0 0.0
    %706 = vmatpush1.msra.mxu0 %v664
    %707 = vmatprep.subr.mxu0 0.0
    %708 = vmatpush1.msra.mxu0 %v663
    %709 = vmatprep.subr.mxu0 0.0
    %710 = vmatpush1.msra.mxu0 %v662
    %711 = vmatprep.subr.mxu0 0.0
    %712 = vmatpush1.msra.mxu0 %v661
    %713 = vmatprep.subr.mxu0 0.0
    %714 = vmatpush1.msra.mxu0 %v660
    %715 = vmatprep.subr.mxu0 0.0
    %716 = vmatpush2.msra.mxu0 0.0
    %717 = vmatprep.subr.mxu0 0.0
    %718 = vmatpush2.msra.mxu0 0.0
    %719 = vmatprep.subr.mxu0 0.0
    %720 = vmatpush2.msra.mxu0 0.0
    %721 = vmatprep.subr.mxu0 0.0
    %722 = vmatpush2.msra.mxu0 0.0
    %723 = vmatprep.subr.mxu0 0.0
    %724 = vmatpush2.msra.mxu0 0.0
    %725 = vmatprep.subr.mxu0 0.0
    %726 = vmatpush2.msra.mxu0 0.0
    %727 = vmatprep.subr.mxu0 0.0
    %728 = vmatpush2.msra.mxu0 0.0
    %729 = vmatprep.subr.mxu0 0.0
    %730 = vmatpush2.msra.mxu0 0.0
    %731 = vmatprep.subr.mxu0 0.0
    %732 = vmatpush2.msra.mxu0 0.0
    %733 = vmatprep.subr.mxu0 0.0
    %734 = vmatpush2.msra.mxu0 0.0
    %735 = vmatprep.subr.mxu0 0.0
    %736 = vmatpush2.msra.mxu0 0.0
    %737 = vmatprep.subr.mxu0 0.0
    %738 = vmatpush2.msra.mxu0 0.0
    %739 = vmatprep.subr.mxu0 0.0
    %740 = vmatpush2.msra.mxu0 0.0
    %741 = vmatprep.subr.mxu0 0.0
    %742 = vmatpush2.msra.mxu0 0.0
    %743 = vmatprep.subr.mxu0 0.0
    %744 = vmatpush2.msra.mxu0 0.0
    %745 = vmatprep.subr.mxu0 0.0
    %746 = vmatpush2.msra.mxu0 0.0
    %747 = vmatprep.mubr.f32.mxu0 0.0
    %748 = vmatmul.mubr.f32.gmra.mxu0 %v659
    %v749 = vpop.f32.mrf.mxu0
    %v750 = vadd.f32 %v681, %v749
    %v751 = vpop.f32.mrf.mxu0
    %752 = vdwg.mxu0
    %v753 = vmax.f32 %v750, 0.0
    %v754 = vld [vmem:[#allocation2 + $0x8] sm:$0xff]
    %v755 = vld [vmem:[#allocation2 + $0x10] sm:$0xff]
    %v756 = vld [vmem:[#allocation2 + $0x18] sm:$0xff]
    %v757 = vld [vmem:[#allocation2 + $0x38] sm:$0xff]
    %v758 = vld [vmem:[#allocation2 + $0x40] sm:$0xff]
    %v759 = vld [vmem:[#allocation2 + $0x48] sm:$0xff]
    %v760 = vld [vmem:[#allocation2 + $0x68] sm:$0xff]
    %v761 = vld [vmem:[#allocation2 + $0x70] sm:$0xff]
    %v762 = vld [vmem:[#allocation2 + $0x78] sm:$0xff]
    %v763 = vld [vmem:[#allocation2 + $0x98] sm:$0xff]
    %v764 = vld [vmem:[#allocation2 + $0xa0] sm:$0xff]
    %v765 = vld [vmem:[#allocation2 + $0xa8] sm:$0xff]
    %v766 = vld [vmem:[#allocation2 + $0xc8] sm:$0xff]
    %v767 = vld [vmem:[#allocation2 + $0xd0] sm:$0xff]
    %v768 = vld [vmem:[#allocation2 + $0xd8] sm:$0xff]
    %v769 = vld [vmem:[#allocation2 + $0xf8] sm:$0xff]
    %v770 = vld [vmem:[#allocation2 + $0x100] sm:$0xff]
    %v771 = vld [vmem:[#allocation2 + $0x108] sm:$0xff]
    %v772 = vld [vmem:[#allocation2 + $0x128] sm:$0xff]
    %v773 = vld [vmem:[#allocation2 + $0x130] sm:$0xff]
    %v774 = vld [vmem:[#allocation2 + $0x138] sm:$0xff]
    %v775 = vld [vmem:[#allocation2 + $0x158] sm:$0xff]
    %v776 = vld [vmem:[#allocation2 + $0x160] sm:$0xff]
    %v777 = vld [vmem:[#allocation2 + $0x168] sm:$0xff]
    %v778 = vld [vmem:[%s4 + $0x2] sm:$0x7]
    %v780 = vlaneseq
    %v781 = vshrl.u32 %v780, 7
    %v782 = vsub.s32 0, %v781
    %v783 = vrot.slane %v778, %v782
    %v784 = vlaneseq
    %v785 = vshrl.u32 %v784, 7
    %v786 = vsub.s32 1, %v785
    %v787 = vrot.slane %v778, %v786
    %v788 = vlaneseq
    %v789 = vshrl.u32 %v788, 7
    %v790 = vsub.s32 2, %v789
    %v791 = vrot.slane %v778, %v790
    %vm795 = vcmask 523264
    %v797 = vsel %vm795, %v753, 0
    %799 = vmatprep.subr.mxu0 0.0
    %800 = vmatpush1.msra.mxu0 0.0
    %801 = vmatprep.subr.mxu0 0.0
    %802 = vmatpush1.msra.mxu0 0.0
    %803 = vmatprep.subr.mxu0 0.0
    %804 = vmatpush1.msra.mxu0 0.0
    %805 = vmatprep.subr.mxu0 0.0
    %806 = vmatpush1.msra.mxu0 0.0
    %807 = vmatprep.subr.mxu0 0.0
    %808 = vmatpush1.msra.mxu0 0.0
    %809 = vmatprep.subr.mxu0 0.0
    %810 = vmatpush1.msra.mxu0 0.0
    %811 = vmatprep.subr.mxu0 0.0
    %812 = vmatpush1.msra.mxu0 0.0
    %813 = vmatprep.subr.mxu0 0.0
    %814 = vmatpush1.msra.mxu0 0.0
    %815 = vmatprep.subr.mxu0 %v776
    %816 = vmatpush1.msra.mxu0 %v775
    %817 = vmatprep.subr.mxu0 %v773
    %818 = vmatpush1.msra.mxu0 %v772
    %819 = vmatprep.subr.mxu0 %v770
    %820 = vmatpush1.msra.mxu0 %v769
    %821 = vmatprep.subr.mxu0 %v767
    %822 = vmatpush1.msra.mxu0 %v766
    %823 = vmatprep.subr.mxu0 %v764
    %824 = vmatpush1.msra.mxu0 %v763
    %825 = vmatprep.subr.mxu0 %v761
    %826 = vmatpush1.msra.mxu0 %v760
    %827 = vmatprep.subr.mxu0 %v758
    %828 = vmatpush1.msra.mxu0 %v757
    %829 = vmatprep.subr.mxu0 %v755
    %830 = vmatpush1.msra.mxu0 %v754
    %831 = vmatprep.subr.mxu0 0.0
    %832 = vmatpush2.msra.mxu0 0.0
    %833 = vmatprep.subr.mxu0 0.0
    %834 = vmatpush2.msra.mxu0 0.0
    %835 = vmatprep.subr.mxu0 0.0
    %836 = vmatpush2.msra.mxu0 0.0
    %837 = vmatprep.subr.mxu0 0.0
    %838 = vmatpush2.msra.mxu0 0.0
    %839 = vmatprep.subr.mxu0 0.0
    %840 = vmatpush2.msra.mxu0 0.0
    %841 = vmatprep.subr.mxu0 0.0
    %842 = vmatpush2.msra.mxu0 0.0
    %843 = vmatprep.subr.mxu0 0.0
    %844 = vmatpush2.msra.mxu0 0.0
    %845 = vmatprep.subr.mxu0 0.0
    %846 = vmatpush2.msra.mxu0 0.0
    %847 = vmatprep.subr.mxu0 0.0
    %848 = vmatpush2.msra.mxu0 0.0
    %849 = vmatprep.subr.mxu0 0.0
    %850 = vmatpush2.msra.mxu0 0.0
    %851 = vmatprep.subr.mxu0 0.0
    %852 = vmatpush2.msra.mxu0 0.0
    %853 = vmatprep.subr.mxu0 0.0
    %854 = vmatpush2.msra.mxu0 0.0
    %855 = vmatprep.subr.mxu0 0.0
    %856 = vmatpush2.msra.mxu0 0.0
    %857 = vmatprep.subr.mxu0 0.0
    %858 = vmatpush2.msra.mxu0 0.0
    %859 = vmatprep.subr.mxu0 0.0
    %860 = vmatpush2.msra.mxu0 0.0
    %861 = vmatprep.subr.mxu0 0.0
    %862 = vmatpush2.msra.mxu0 0.0
    %863 = vmatprep.mubr.f32.mxu0 0.0
    %864 = vmatmul.mubr.f32.gmra.mxu0 %v797
    %v865 = vpop.f32.mrf.mxu0
    %v866 = vadd.f32 %v783, %v865
    %v867 = vpop.f32.mrf.mxu0
    %v868 = vadd.f32 %v787, %v867
    %869 = vdwg.mxu0
    %870 = vmatprep.subr.mxu0 0.0
    %871 = vmatpush1.msra.mxu0 0.0
    %872 = vmatprep.subr.mxu0 0.0
    %873 = vmatpush1.msra.mxu0 0.0
    %874 = vmatprep.subr.mxu0 0.0
    %875 = vmatpush1.msra.mxu0 0.0
    %876 = vmatprep.subr.mxu0 0.0
    %877 = vmatpush1.msra.mxu0 0.0
    %878 = vmatprep.subr.mxu0 0.0
    %879 = vmatpush1.msra.mxu0 0.0
    %880 = vmatprep.subr.mxu0 0.0
    %881 = vmatpush1.msra.mxu0 0.0
    %882 = vmatprep.subr.mxu0 0.0
    %883 = vmatpush1.msra.mxu0 0.0
    %884 = vmatprep.subr.mxu0 0.0
    %885 = vmatpush1.msra.mxu0 0.0
    %886 = vmatprep.subr.mxu0 0.0
    %887 = vmatpush1.msra.mxu0 %v777
    %888 = vmatprep.subr.mxu0 0.0
    %889 = vmatpush1.msra.mxu0 %v774
    %890 = vmatprep.subr.mxu0 0.0
    %891 = vmatpush1.msra.mxu0 %v771
    %892 = vmatprep.subr.mxu0 0.0
    %893 = vmatpush1.msra.mxu0 %v768
    %894 = vmatprep.subr.mxu0 0.0
    %895 = vmatpush1.msra.mxu0 %v765
    %896 = vmatprep.subr.mxu0 0.0
    %897 = vmatpush1.msra.mxu0 %v762
    %898 = vmatprep.subr.mxu0 0.0
    %899 = vmatpush1.msra.mxu0 %v759
    %900 = vmatprep.subr.mxu0 0.0
    %901 = vmatpush1.msra.mxu0 %v756
    %902 = vmatprep.subr.mxu0 0.0
    %903 = vmatpush2.msra.mxu0 0.0
    %904 = vmatprep.subr.mxu0 0.0
    %905 = vmatpush2.msra.mxu0 0.0
    %906 = vmatprep.subr.mxu0 0.0
    %907 = vmatpush2.msra.mxu0 0.0
    %908 = vmatprep.subr.mxu0 0.0
    %909 = vmatpush2.msra.mxu0 0.0
    %910 = vmatprep.subr.mxu0 0.0
    %911 = vmatpush2.msra.mxu0 0.0
    %912 = vmatprep.subr.mxu0 0.0
    %913 = vmatpush2.msra.mxu0 0.0
    %914 = vmatprep.subr.mxu0 0.0
    %915 = vmatpush2.msra.mxu0 0.0
    %916 = vmatprep.subr.mxu0 0.0
    %917 = vmatpush2.msra.mxu0 0.0
    %918 = vmatprep.subr.mxu0 0.0
    %919 = vmatpush2.msra.mxu0 0.0
    %920 = vmatprep.subr.mxu0 0.0
    %921 = vmatpush2.msra.mxu0 0.0
    %922 = vmatprep.subr.mxu0 0.0
    %923 = vmatpush2.msra.mxu0 0.0
    %924 = vmatprep.subr.mxu0 0.0
    %925 = vmatpush2.msra.mxu0 0.0
    %926 = vmatprep.subr.mxu0 0.0
    %927 = vmatpush2.msra.mxu0 0.0
    %928 = vmatprep.subr.mxu0 0.0
    %929 = vmatpush2.msra.mxu0 0.0
    %930 = vmatprep.subr.mxu0 0.0
    %931 = vmatpush2.msra.mxu0 0.0
    %932 = vmatprep.subr.mxu0 0.0
    %933 = vmatpush2.msra.mxu0 0.0
    %934 = vmatprep.mubr.f32.mxu0 0.0
    %935 = vmatmul.mubr.f32.gmra.mxu0 %v797
    %v936 = vpop.f32.mrf.mxu0
    %v937 = vadd.f32 %v791, %v936
    %v938 = vpop.f32.mrf.mxu0
    %939 = vdwg.mxu0
    %v941 = vsel %vm795, %v866, 0
    %v944 = vsel %vm795, %v868, 0
    %946 = vmatprep.subr.mxu0 0.0
    %947 = vmatpush1.xpose.msra.mxu0 0.0
    %948 = vmatprep.subr.mxu0 0.0
    %949 = vmatpush1.xpose.msra.mxu0 0.0
    %950 = vmatprep.subr.mxu0 0.0
    %951 = vmatpush1.xpose.msra.mxu0 0.0
    %952 = vmatprep.subr.mxu0 0.0
    %953 = vmatpush1.xpose.msra.mxu0 0.0
    %954 = vmatprep.subr.mxu0 0.0
    %955 = vmatpush1.xpose.msra.mxu0 0.0
    %956 = vmatprep.subr.mxu0 0.0
    %957 = vmatpush1.xpose.msra.mxu0 0.0
    %958 = vmatprep.subr.mxu0 0.0
    %959 = vmatpush1.xpose.msra.mxu0 0.0
    %960 = vmatprep.subr.mxu0 0.0
    %961 = vmatpush1.xpose.msra.mxu0 0.0
    %962 = vmatprep.subr.mxu0 0.0
    %963 = vmatpush1.xpose.msra.mxu0 0.0
    %964 = vmatprep.subr.mxu0 0.0
    %965 = vmatpush1.xpose.msra.mxu0 0.0
    %966 = vmatprep.subr.mxu0 0.0
    %967 = vmatpush1.xpose.msra.mxu0 0.0
    %968 = vmatprep.subr.mxu0 0.0
    %969 = vmatpush1.xpose.msra.mxu0 0.0
    %970 = vmatprep.subr.mxu0 0.0
    %971 = vmatpush1.xpose.msra.mxu0 0.0
    %972 = vmatprep.subr.mxu0 0.0
    %973 = vmatpush1.xpose.msra.mxu0 0.0
    %974 = vmatprep.subr.mxu0 0.0
    %975 = vmatpush1.xpose.msra.mxu0 0.0
    %976 = vmatprep.subr.mxu0 0.0
    %977 = vmatpush1.xpose.msra.mxu0 %v944
    %978 = vmatprep.subr.mxu0 0.0
    %979 = vmatpush2.xpose.msra.mxu0 0.0
    %980 = vmatprep.subr.mxu0 0.0
    %981 = vmatpush2.xpose.msra.mxu0 0.0
    %982 = vmatprep.subr.mxu0 0.0
    %983 = vmatpush2.xpose.msra.mxu0 0.0
    %984 = vmatprep.subr.mxu0 0.0
    %985 = vmatpush2.xpose.msra.mxu0 0.0
    %986 = vmatprep.subr.mxu0 0.0
    %987 = vmatpush2.xpose.msra.mxu0 0.0
    %988 = vmatprep.subr.mxu0 0.0
    %989 = vmatpush2.xpose.msra.mxu0 0.0
    %990 = vmatprep.subr.mxu0 0.0
    %991 = vmatpush2.xpose.msra.mxu0 0.0
    %992 = vmatprep.subr.mxu0 0.0
    %993 = vmatpush2.xpose.msra.mxu0 0.0
    %994 = vmatprep.subr.mxu0 0.0
    %995 = vmatpush2.xpose.msra.mxu0 0.0
    %996 = vmatprep.subr.mxu0 0.0
    %997 = vmatpush2.xpose.msra.mxu0 0.0
    %998 = vmatprep.subr.mxu0 0.0
    %999 = vmatpush2.xpose.msra.mxu0 0.0
    %1000 = vmatprep.subr.mxu0 0.0
    %1001 = vmatpush2.xpose.msra.mxu0 0.0
    %1002 = vmatprep.subr.mxu0 0.0
    %1003 = vmatpush2.xpose.msra.mxu0 0.0
    %1004 = vmatprep.subr.mxu0 0.0
    %1005 = vmatpush2.xpose.msra.mxu0 0.0
    %1006 = vmatprep.subr.mxu0 0.0
    %1007 = vmatpush2.xpose.msra.mxu0 0.0
    %1008 = vmatprep.subr.mxu0 0.0
    %1009 = vmatpush2.xpose.msra.mxu0 0.0
    %1010 = vmatprep.mubr.f32.mxu0 0.0
    %1011 = vmatmul.mubr.f32.gmra.mxu0 %v941
    %v1012 = vpop.f32.mrf.mxu0
    %v1013 = vadd.f32 0.0, %v1012
    %v1014 = vpop.f32.mrf.mxu0
    %1015 = vdwg.mxu0
    %vm1016 = vcmask 64512
    %v1017 = vsel %vm1016, %v1013, -inf
    %1018 = vmax.xlane.f32.xlu0 %v1017
    %v1019 = vpop.xlane.xlu0 %1018
    %v1020 = vsub.f32 %v1013, %v1019
    %v1021 = vmul.f32 %v1020, 1.442695
    %v1022 = vpow.pop %v1021
    %v1023 = vsel %vm1016, %v1022, 0.0
    %1024 = vadd.xlane.f32.xlu0 %v1023
    %v1025 = vpop.xlane.xlu0 %1024
    %v1026 = vrcp.pop %v1025
    %v1027 = vmul.f32 %v1022, %v1026
    %v1029 = vsel %vm1016, %v1027, 0
    %1031 = vmatprep.subr.mxu0 0.0
    %1032 = vmatpush1.msra.mxu0 0.0
    %1033 = vmatprep.subr.mxu0 0.0
    %1034 = vmatpush1.msra.mxu0 0.0
    %1035 = vmatprep.subr.mxu0 0.0
    %1036 = vmatpush1.msra.mxu0 0.0
    %1037 = vmatprep.subr.mxu0 0.0
    %1038 = vmatpush1.msra.mxu0 0.0
    %1039 = vmatprep.subr.mxu0 0.0
    %1040 = vmatpush1.msra.mxu0 0.0
    %1041 = vmatprep.subr.mxu0 0.0
    %1042 = vmatpush1.msra.mxu0 0.0
    %1043 = vmatprep.subr.mxu0 0.0
    %1044 = vmatpush1.msra.mxu0 0.0
    %1045 = vmatprep.subr.mxu0 0.0
    %1046 = vmatpush1.msra.mxu0 0.0
    %1047 = vmatprep.subr.mxu0 0.0
    %1048 = vmatpush1.msra.mxu0 0.0
    %1049 = vmatprep.subr.mxu0 0.0
    %1050 = vmatpush1.msra.mxu0 0.0
    %1051 = vmatprep.subr.mxu0 0.0
    %1052 = vmatpush1.msra.mxu0 0.0
    %1053 = vmatprep.subr.mxu0 0.0
    %1054 = vmatpush1.msra.mxu0 0.0
    %1055 = vmatprep.subr.mxu0 0.0
    %1056 = vmatpush1.msra.mxu0 0.0
    %1057 = vmatprep.subr.mxu0 0.0
    %1058 = vmatpush1.msra.mxu0 0.0
    %1059 = vmatprep.subr.mxu0 0.0
    %1060 = vmatpush1.msra.mxu0 0.0
    %1061 = vmatprep.subr.mxu0 0.0
    %1062 = vmatpush1.msra.mxu0 %v937
    %1063 = vmatprep.subr.mxu0 0.0
    %1064 = vmatpush2.msra.mxu0 0.0
    %1065 = vmatprep.subr.mxu0 0.0
    %1066 = vmatpush2.msra.mxu0 0.0
    %1067 = vmatprep.subr.mxu0 0.0
    %1068 = vmatpush2.msra.mxu0 0.0
    %1069 = vmatprep.subr.mxu0 0.0
    %1070 = vmatpush2.msra.mxu0 0.0
    %1071 = vmatprep.subr.mxu0 0.0
    %1072 = vmatpush2.msra.mxu0 0.0
    %1073 = vmatprep.subr.mxu0 0.0
    %1074 = vmatpush2.msra.mxu0 0.0
    %1075 = vmatprep.subr.mxu0 0.0
    %1076 = vmatpush2.msra.mxu0 0.0
    %1077 = vmatprep.subr.mxu0 0.0
    %1078 = vmatpush2.msra.mxu0 0.0
    %1079 = vmatprep.subr.mxu0 0.0
    %1080 = vmatpush2.msra.mxu0 0.0
    %1081 = vmatprep.subr.mxu0 0.0
    %1082 = vmatpush2.msra.mxu0 0.0
    %1083 = vmatprep.subr.mxu0 0.0
    %1084 = vmatpush2.msra.mxu0 0.0
    %1085 = vmatprep.subr.mxu0 0.0
    %1086 = vmatpush2.msra.mxu0 0.0
    %1087 = vmatprep.subr.mxu0 0.0
    %1088 = vmatpush2.msra.mxu0 0.0
    %1089 = vmatprep.subr.mxu0 0.0
    %1090 = vmatpush2.msra.mxu0 0.0
    %1091 = vmatprep.subr.mxu0 0.0
    %1092 = vmatpush2.msra.mxu0 0.0
    %1093 = vmatprep.subr.mxu0 0.0
    %1094 = vmatpush2.msra.mxu0 0.0
    %1095 = vmatprep.mubr.f32.mxu0 0.0
    %1096 = vmatmul.mubr.f32.gmra.mxu0 %v1029
    %v1097 = vpop.f32.mrf.mxu0
    %v1098 = vadd.f32 %v753, %v1097
    %v1099 = vpop.f32.mrf.mxu0
    %1100 = vdwg.mxu0
    %v1101 = vsel %vm795, %v1098, 0.0
    %1102 = vadd.xlane.f32.xlu0 %v1101
    %v1103 = vpop.xlane.xlu0 %1102
    %v1104 = vrcp.pop 64.0
    %v1105 = vmul.f32 %v1103, %v1104
    %v1106 = vmul.f32 %v1098, %v1098
    %v1107 = vsel %vm795, %v1106, 0.0
    %1108 = vadd.xlane.f32.xlu0 %v1107
    %v1109 = vpop.xlane.xlu0 %1108
    %v1110 = vmul.f32 %v1109, %v1104
    %v1111 = vmul.f32 %v1105, %v1105
    %v1112 = vsub.f32 %v1110, %v1111
    %v1113 = vmax.f32 %v1112, 0.0
    %v1114 = vsub.f32 %v1098, %v1105
    %v1115 = vadd.f32 %v1113, 1e-05
    %v1116 = vrsqrt.pop %v1115
    %v1117 = vmul.f32 %v1114, %v1116
    %v1118 = vld [vmem:[#allocation2 + $0x20] sm:$0xff]
    %v1119 = vld [vmem:[#allocation2 + $0x50] sm:$0xff]
    %v1120 = vld [vmem:[#allocation2 + $0x80] sm:$0xff]
    %v1121 = vld [vmem:[#allocation2 + $0xb0] sm:$0xff]
    %v1122 = vld [vmem:[#allocation2 + $0xe0] sm:$0xff]
    %v1123 = vld [vmem:[#allocation2 + $0x110] sm:$0xff]
    %v1124 = vld [vmem:[#allocation2 + $0x140] sm:$0xff]
    %v1125 = vld [vmem:[#allocation2 + $0x170] sm:$0xff]
    %v1126 = vld [vmem:[%s4 + $0x5] sm:$0x1]
    %v1128 = vlaneseq
    %v1129 = vshrl.u32 %v1128, 7
    %v1130 = vsub.s32 0, %v1129
    %v1131 = vrot.slane %v1126, %v1130
    %v1134 = vsel %vm795, %v1117, 0
    %1136 = vmatprep.subr.mxu0 0.0
    %1137 = vmatpush1.msra.mxu0 0.0
    %1138 = vmatprep.subr.mxu0 0.0
    %1139 = vmatpush1.msra.mxu0 0.0
    %1140 = vmatprep.subr.mxu0 0.0
    %1141 = vmatpush1.msra.mxu0 0.0
    %1142 = vmatprep.subr.mxu0 0.0
    %1143 = vmatpush1.msra.mxu0 0.0
    %1144 = vmatprep.subr.mxu0 0.0
    %1145 = vmatpush1.msra.mxu0 0.0
    %1146 = vmatprep.subr.mxu0 0.0
    %1147 = vmatpush1.msra.mxu0 0.0
    %1148 = vmatprep.subr.mxu0 0.0
    %1149 = vmatpush1.msra.mxu0 0.0
    %1150 = vmatprep.subr.mxu0 0.0
    %1151 = vmatpush1.msra.mxu0 0.0
    %1152 = vmatprep.subr.mxu0 0.0
    %1153 = vmatpush1.msra.mxu0 %v1125
    %1154 = vmatprep.subr.mxu0 0.0
    %1155 = vmatpush1.msra.mxu0 %v1124
    %1156 = vmatprep.subr.mxu0 0.0
    %1157 = vmatpush1.msra.mxu0 %v1123
    %1158 = vmatprep.subr.mxu0 0.0
    %1159 = vmatpush1.msra.mxu0 %v1122
    %1160 = vmatprep.subr.mxu0 0.0
    %1161 = vmatpush1.msra.mxu0 %v1121
    %1162 = vmatprep.subr.mxu0 0.0
    %1163 = vmatpush1.msra.mxu0 %v1120
    %1164 = vmatprep.subr.mxu0 0.0
    %1165 = vmatpush1.msra.mxu0 %v1119
    %1166 = vmatprep.subr.mxu0 0.0
    %1167 = vmatpush1.msra.mxu0 %v1118
    %1168 = vmatprep.subr.mxu0 0.0
    %1169 = vmatpush2.msra.mxu0 0.0
    %1170 = vmatprep.subr.mxu0 0.0
    %1171 = vmatpush2.msra.mxu0 0.0
    %1172 = vmatprep.subr.mxu0 0.0
    %1173 = vmatpush2.msra.mxu0 0.0
    %1174 = vmatprep.subr.mxu0 0.0
    %1175 = vmatpush2.msra.mxu0 0.0
    %1176 = vmatprep.subr.mxu0 0.0
    %1177 = vmatpush2.msra.mxu0 0.0
    %1178 = vmatprep.subr.mxu0 0.0
    %1179 = vmatpush2.msra.mxu0 0.0
    %1180 = vmatprep.subr.mxu0 0.0
    %1181 = vmatpush2.msra.mxu0 0.0
    %1182 = vmatprep.subr.mxu0 0.0
    %1183 = vmatpush2.msra.mxu0 0.0
    %1184 = vmatprep.subr.mxu0 0.0
    %1185 = vmatpush2.msra.mxu0 0.0
    %1186 = vmatprep.subr.mxu0 0.0
    %1187 = vmatpush2.msra.mxu0 0.0
    %1188 = vmatprep.subr.mxu0 0.0
    %1189 = vmatpush2.msra.mxu0 0.0
    %1190 = vmatprep.subr.mxu0 0.0
    %1191 = vmatpush2.msra.mxu0 0.0
    %1192 = vmatprep.subr.mxu0 0.0
    %1193 = vmatpush2.msra.mxu0 0.0
    %1194 = vmatprep.subr.mxu0 0.0
    %1195 = vmatpush2.msra.mxu0 0.0
    %1196 = vmatprep.subr.mxu0 0.0
    %1197 = vmatpush2.msra.mxu0 0.0
    %1198 = vmatprep.subr.mxu0 0.0
    %1199 = vmatpush2.msra.mxu0 0.0
    %1200 = vmatprep.mubr.f32.mxu0 0.0
    %1201 = vmatmul.mubr.f32.gmra.mxu0 %v1134
    %v1202 = vpop.f32.mrf.mxu0
    %v1203 = vadd.f32 %v1131, %v1202
    %v1204 = vpop.f32.mrf.mxu0
    %1205 = vdwg.mxu0
    %v1206 = vmax.f32 %v1203, 0.0
    %v1207 = vsel %vm795, %v1206, 0.0
    %1208 = vadd.xlane.f32.xlu0 %v1207
    %v1209 = vpop.xlane.xlu0 %1208
    %v1210 = vmul.f32 %v1209, %v1104
    %v1211 = vmul.f32 %v1206, %v1206
    %v1212 = vsel %vm795, %v1211, 0.0
    %1213 = vadd.xlane.f32.xlu0 %v1212
    %v1214 = vpop.xlane.xlu0 %1213
    %v1215 = vmul.f32 %v1214, %v1104
    %v1216 = vmul.f32 %v1210, %v1210
    %v1217 = vsub.f32 %v1215, %v1216
    %v1218 = vmax.f32 %v1217, 0.0
    %v1219 = vsub.f32 %v1206, %v1210
    %v1220 = vadd.f32 %v1218, 1e-05
    %v1221 = vrsqrt.pop %v1220
    %v1222 = vmul.f32 %v1219, %v1221
    %v1223 = vld [vmem:[#allocation2 + $0x28] sm:$0xff]
    %v1224 = vld [vmem:[#allocation2 + $0x58] sm:$0xff]
    %v1225 = vld [vmem:[#allocation2 + $0x88] sm:$0xff]
    %v1226 = vld [vmem:[#allocation2 + $0xb8] sm:$0xff]
    %v1227 = vld [vmem:[#allocation2 + $0xe8] sm:$0xff]
    %v1228 = vld [vmem:[#allocation2 + $0x118] sm:$0xff]
    %v1229 = vld [vmem:[#allocation2 + $0x148] sm:$0xff]
    %v1230 = vld [vmem:[#allocation2 + $0x178] sm:$0xff]
    %v1231 = vld [vmem:[%s4 + $0x6] sm:$0x1]
    %v1233 = vlaneseq
    %v1234 = vshrl.u32 %v1233, 7
    %v1235 = vsub.s32 0, %v1234
    %v1236 = vrot.slane %v1231, %v1235
    %v1239 = vsel %vm795, %v1222, 0
    %1241 = vmatprep.subr.mxu0 0.0
    %1242 = vmatpush1.msra.mxu0 0.0
    %1243 = vmatprep.subr.mxu0 0.0
    %1244 = vmatpush1.msra.mxu0 0.0
    %1245 = vmatprep.subr.mxu0 0.0
    %1246 = vmatpush1.msra.mxu0 0.0
    %1247 = vmatprep.subr.mxu0 0.0
    %1248 = vmatpush1.msra.mxu0 0.0
    %1249 = vmatprep.subr.mxu0 0.0
    %1250 = vmatpush1.msra.mxu0 0.0
    %1251 = vmatprep.subr.mxu0 0.0
    %1252 = vmatpush1.msra.mxu0 0.0
    %1253 = vmatprep.subr.mxu0 0.0
    %1254 = vmatpush1.msra.mxu0 0.0
    %1255 = vmatprep.subr.mxu0 0.0
    %1256 = vmatpush1.msra.mxu0 0.0
    %1257 = vmatprep.subr.mxu0 0.0
    %1258 = vmatpush1.msra.mxu0 %v1230
    %1259 = vmatprep.subr.mxu0 0.0
    %1260 = vmatpush1.msra.mxu0 %v1229
    %1261 = vmatprep.subr.mxu0 0.0
    %1262 = vmatpush1.msra.mxu0 %v1228
    %1263 = vmatprep.subr.mxu0 0.0
    %1264 = vmatpush1.msra.mxu0 %v1227
    %1265 = vmatprep.subr.mxu0 0.0
    %1266 = vmatpush1.msra.mxu0 %v1226
    %1267 = vmatprep.subr.mxu0 0.0
    %1268 = vmatpush1.msra.mxu0 %v1225
    %1269 = vmatprep.subr.mxu0 0.0
    %1270 = vmatpush1.msra.mxu0 %v1224
    %1271 = vmatprep.subr.mxu0 0.0
    %1272 = vmatpush1.msra.mxu0 %v1223
    %1273 = vmatprep.subr.mxu0 0.0
    %1274 = vmatpush2.msra.mxu0 0.0
    %1275 = vmatprep.subr.mxu0 0.0
    %1276 = vmatpush2.msra.mxu0 0.0
    %1277 = vmatprep.subr.mxu0 0.0
    %1278 = vmatpush2.msra.mxu0 0.0
    %1279 = vmatprep.subr.mxu0 0.0
    %1280 = vmatpush2.msra.mxu0 0.0
    %1281 = vmatprep.subr.mxu0 0.0
    %1282 = vmatpush2.msra.mxu0 0.0
    %1283 = vmatprep.subr.mxu0 0.0
    %1284 = vmatpush2.msra.mxu0 0.0
    %1285 = vmatprep.subr.mxu0 0.0
    %1286 = vmatpush2.msra.mxu0 0.0
    %1287 = vmatprep.subr.mxu0 0.0
    %1288 = vmatpush2.msra.mxu0 0.0
    %1289 = vmatprep.subr.mxu0 0.0
    %1290 = vmatpush2.msra.mxu0 0.0
    %1291 = vmatprep.subr.mxu0 0.0
    %1292 = vmatpush2.msra.mxu0 0.0
    %1293 = vmatprep.subr.mxu0 0.0
    %1294 = vmatpush2.msra.mxu0 0.0
    %1295 = vmatprep.subr.mxu0 0.0
    %1296 = vmatpush2.msra.mxu0 0.0
    %1297 = vmatprep.subr.mxu0 0.0
    %1298 = vmatpush2.msra.mxu0 0.0
    %1299 = vmatprep.subr.mxu0 0.0
    %1300 = vmatpush2.msra.mxu0 0.0
    %1301 = vmatprep.subr.mxu0 0.0
    %1302 = vmatpush2.msra.mxu0 0.0
    %1303 = vmatprep.subr.mxu0 0.0
    %1304 = vmatpush2.msra.mxu0 0.0
    %1305 = vmatprep.mubr.f32.mxu0 0.0
    %1306 = vmatmul.mubr.f32.gmra.mxu0 %v1239
    %v1307 = vpop.f32.mrf.mxu0
    %v1308 = vadd.f32 %v1236, %v1307
    %v1309 = vpop.f32.mrf.mxu0
    %1310 = vdwg.mxu0
    %v1311 = vmax.f32 %v1308, 0.0
    %vm1312 = vcmask 261120
    %v1313 = vsel %vm1312, %v1311, 0.0
    %1314 = vadd.xlane.f32.xlu0 %v1313
    %v1315 = vpop.xlane.xlu0 %1314
    %v1316 = vrcp.pop 32.0
    %v1317 = vmul.f32 %v1315, %v1316
    %v1318 = vmul.f32 %v1311, %v1311
    %v1319 = vsel %vm1312, %v1318, 0.0
    %1320 = vadd.xlane.f32.xlu0 %v1319
    %v1321 = vpop.xlane.xlu0 %1320
    %v1322 = vmul.f32 %v1321, %v1316
    %v1323 = vmul.f32 %v1317, %v1317
    %v1324 = vsub.f32 %v1322, %v1323
    %v1325 = vmax.f32 %v1324, 0.0
    %v1326 = vsub.f32 %v1311, %v1317
    %v1327 = vadd.f32 %v1325, 1e-05
    %v1328 = vrsqrt.pop %v1327
    %v1329 = vmul.f32 %v1326, %v1328
    %v1330 = vld [vmem:[%s4 + $0x7] sm:$0x1]
    %v1332 = vlaneseq
    %v1333 = vshrl.u32 %v1332, 7
    %v1334 = vsub.s32 0, %v1333
    %v1335 = vrot.slane %v1330, %v1334
    %v1337 = vmul.f32 %v1329, %v1335
    %v1338 = vsel %vm1312, %v1337, 0.0
    %1339 = vadd.xlane.f32.xlu0 %v1338
    %v1340 = vpop.xlane.xlu0 %1339
    %v1341 = vld [vmem:[%s4 + $0x8] sm:$0x1]
    %v1343 = vlaneseq
    %v1344 = vshrl.u32 %v1343, 7
    %v1345 = vsub.s32 0, %v1344
    %v1346 = vrot.slane %v1341, %v1345
    %v1348 = vadd.f32 %v1340, %v1346
    %1350 = vset.pattern.permute.xlu0 0
    %1351 = vperm.xlu0 %1350, %v1348
    %v1352 = vpop.permute.xlu0 %1351
    %1354 = vst [vmem:[#allocation5] sm:$0xff] %v1352
    // Predicated region
    $region26: #{tpu_custom_call.1} parent=1 // pred_check
      _
    $region27: #{tpu_custom_call.1} parent=1 // pred_check_branch
      %1356 = sbr.rel (0) target = $region29
    $region28: #{tpu_custom_call.1} parent=1 // pred_region
      %s1358 = ssub.s32 128, 128
      %1359 = vsyncadd [#allocation4], %s1358
      %s1361 = sshll.u32 [#allocation5], 4
      %s1362 = int_to_ptr.vmem [resolvable:$true] %s1361
      %1364 = dma.vmem_to_hbm [thread:$0]  %s1362, 128, %s5, [#allocation4]
    $region29: #{tpu_custom_call.1} parent=1 // pred_fallthru
      _
    // Predicated region
    $region30: #{tpu_custom_call.1} parent=1 // pred_check
      _
    $region31: #{tpu_custom_call.1} parent=1 // pred_check_branch
      %1366 = sbr.rel (0) target = $region33
    $region32: #{tpu_custom_call.1} parent=1 // pred_region
      %1367 = dma.done [#allocation4], 128
    $region33: #{tpu_custom_call.1} parent=1 // pred_fallthru
      _
    %1368 = vsyncpa [#allocation3], 1
    %1369 = vsyncpa [#allocation4], 1

</llo_original>
